<compile_context>
chip_gen: v5e
topology: v5e:2x2
jax: 0.10.0
libtpu: 0.0.40
codegen_flags: <defaults>
</compile_context>

<pallas_src>
import math
import functools

import jax
import jax.numpy as jnp
from jax.experimental import pallas as pl
from jax.experimental.pallas import tpu as pltpu

LN_EPS = 1e-5                      # torch.nn.LayerNorm default
_VMEM_LIMIT = 32 * 1024 * 1024     # within default scoped VMEM on v5e / v6e / v7x
_TILE_ROWS = 256                   # row tile over B*S for projection / FFN kernels
_TILE_Q = 256                      # query tile for attention
_TILE_KV = 512                     # key/value tile for attention


def _pick_tile(n, target):
    """Largest tile <= target that divides n and is a multiple of 8 (else n itself)."""
    if n <= target:
        return n
    t = (target // 8) * 8
    while t >= 8:
        if n % t == 0:
            return t
        t -= 8
    return n


# ---------------------------------------------------------------------------
# Kernels
# ---------------------------------------------------------------------------
def _qkv_proj_kernel(x_ref, w_ref, b_ref, q_ref, k_ref, v_ref, *, hidden):
    """Fused QKV projection on one row tile: [tm, H] @ [H, 3H] + b -> q | k | v."""
    x = x_ref[...].astype(jnp.bfloat16)
    qkv = jnp.dot(x, w_ref[...], preferred_element_type=jnp.float32) + b_ref[...]
    qkv = qkv.astype(jnp.bfloat16)
    q_ref[...] = qkv[:, :hidden]
    k_ref[...] = qkv[:, hidden:2 * hidden]
    v_ref[...] = qkv[:, 2 * hidden:]


def _flash_attn_kernel(q_ref, k_ref, v_ref, o_ref, m_sc, l_sc, acc_sc, *, scale):
    """Online-softmax attention for one (batch*head, q-tile) over kv tiles."""
    ki = pl.program_id(2)

    @pl.when(ki == 0)
    def _():
        m_sc[...] = jnp.full(m_sc.shape, -jnp.inf, m_sc.dtype)
        l_sc[...] = jnp.zeros(l_sc.shape, l_sc.dtype)
        acc_sc[...] = jnp.zeros(acc_sc.shape, acc_sc.dtype)

    q = q_ref[0]                                              # [tq, hd] bf16
    k = k_ref[0]                                              # [tk, hd] bf16
    v = v_ref[0]                                              # [tk, hd] bf16

    # scores: q @ k^T (contract head_dim), f32 accumulation on the MXU
    s = jax.lax.dot_general(q, k, (((1,), (1,)), ((), ())),
                            preferred_element_type=jnp.float32) * scale   # [tq, tk]

    m_prev = m_sc[...]
    m_new = jnp.maximum(m_prev, s.max(axis=-1, keepdims=True))
    alpha = jnp.exp(m_prev - m_new)
    p = jnp.exp(s - m_new)
    l_sc[...] = alpha * l_sc[...] + p.sum(axis=-1, keepdims=True)
    acc_sc[...] = alpha * acc_sc[...] + jnp.dot(
        p.astype(jnp.bfloat16), v, preferred_element_type=jnp.float32)
    m_sc[...] = m_new

    @pl.when(ki == pl.num_programs(2) - 1)
    def _():
        inv_l = pl.reciprocal(l_sc[...], approx=True)
        o_ref[0] = (acc_sc[...] * inv_l).astype(o_ref.dtype)


def _post_attn_kernel(ctx_ref, x_ref, wo_ref, bo_ref, w1_ref, b1_ref,
                      w2_ref, b2_ref, g1_ref, beta1_ref, g2_ref, beta2_ref,
                      out_ref):
    """Fused (attention output proj) + residual + LN1 + FFN + residual + LN2 per row tile."""
    ctx = ctx_ref[...]                                        # [tm, H] f32
    x = x_ref[...]                                            # [tm, H] f32

    attn = jnp.dot(ctx.astype(jnp.bfloat16), wo_ref[...],
                   preferred_element_type=jnp.float32) + bo_ref[...]

    h1 = x + attn
    mu = jnp.mean(h1, axis=-1, keepdims=True)
    var = jnp.mean(jnp.square(h1 - mu), axis=-1, keepdims=True)
    h1n = (h1 - mu) * jax.lax.rsqrt(var + LN_EPS) * g1_ref[...] + beta1_ref[...]

    f = jnp.dot(h1n.astype(jnp.bfloat16), w1_ref[...],
                preferred_element_type=jnp.float32) + b1_ref[...]
    f = jnp.maximum(f, 0.0)                                   # ReLU
    y = jnp.dot(f.astype(jnp.bfloat16), w2_ref[...],
                preferred_element_type=jnp.float32) + b2_ref[...]

    h2 = h1n + y
    mu2 = jnp.mean(h2, axis=-1, keepdims=True)
    var2 = jnp.mean(jnp.square(h2 - mu2), axis=-1, keepdims=True)
    out_ref[...] = ((h2 - mu2) * jax.lax.rsqrt(var2 + LN_EPS)
                    * g2_ref[...] + beta2_ref[...])


# ---------------------------------------------------------------------------
# pallas_call wrappers
# ---------------------------------------------------------------------------
def qkv_projection(x2d, wqkv, bqkv, tile_m):
    n, hidden = x2d.shape
    row_spec = pl.BlockSpec((tile_m, hidden), lambda i: (i, 0))
    return pl.pallas_call(
        functools.partial(_qkv_proj_kernel, hidden=hidden),
        out_shape=tuple(jax.ShapeDtypeStruct((n, hidden), jnp.bfloat16)
                        for _ in range(3)),
        grid=(n // tile_m,),
        in_specs=[pl.BlockSpec((tile_m, hidden), lambda i: (i, 0)),
                  pl.BlockSpec(wqkv.shape, lambda i: (0, 0)),
                  pl.BlockSpec(bqkv.shape, lambda i: (0, 0))],
        out_specs=[row_spec, row_spec, row_spec],
        compiler_params=pltpu.CompilerParams(
            dimension_semantics=("parallel",),
            vmem_limit_bytes=_VMEM_LIMIT),
    )(x2d, wqkv, bqkv)


def flash_self_attention(q, k, v, *, tile_q, tile_k):
    """q, k, v: [batch*heads, S, head_dim] bf16 -> context [batch*heads, S, head_dim] f32."""
    bh, s, hd = q.shape
    scale = 1.0 / math.sqrt(hd)
    grid = (bh, s // tile_q, s // tile_k)
    q_spec = pl.BlockSpec((1, tile_q, hd), lambda b, qi, ki: (b, qi, 0))
    kv_spec = pl.BlockSpec((1, tile_k, hd), lambda b, qi, ki: (b, ki, 0))
    o_spec = pl.BlockSpec((1, tile_q, hd), lambda b, qi, ki: (b, qi, 0))
    return pl.pallas_call(
        functools.partial(_flash_attn_kernel, scale=scale),
        out_shape=jax.ShapeDtypeStruct((bh, s, hd), jnp.float32),
        grid=grid,
        in_specs=[q_spec, kv_spec, kv_spec],
        out_specs=o_spec,
        scratch_shapes=[pltpu.VMEM((tile_q, 1), jnp.float32),   # running max
                        pltpu.VMEM((tile_q, 1), jnp.float32),   # running denom
                        pltpu.VMEM((tile_q, hd), jnp.float32)], # output accumulator
        compiler_params=pltpu.CompilerParams(
            dimension_semantics=("parallel", "parallel", "arbitrary"),
            vmem_limit_bytes=_VMEM_LIMIT),
    )(q, k, v)


def post_attention(ctx2d, x2d, p, tile_m):
    n, hidden = x2d.shape
    in_specs = [
        pl.BlockSpec((tile_m, hidden), lambda i: (i, 0)),       # ctx
        pl.BlockSpec((tile_m, hidden), lambda i: (i, 0)),       # x (residual)
        pl.BlockSpec(p['wo'].shape, lambda i: (0, 0)),
        pl.BlockSpec(p['bo'].shape, lambda i: (0, 0)),
        pl.BlockSpec(p['w1'].shape, lambda i: (0, 0)),
        pl.BlockSpec(p['b1'].shape, lambda i: (0, 0)),
        pl.BlockSpec(p['w2'].shape, lambda i: (0, 0)),
        pl.BlockSpec(p['b2'].shape, lambda i: (0, 0)),
        pl.BlockSpec(p['g1'].shape, lambda i: (0, 0)),
        pl.BlockSpec(p['beta1'].shape, lambda i: (0, 0)),
        pl.BlockSpec(p['g2'].shape, lambda i: (0, 0)),
        pl.BlockSpec(p['beta2'].shape, lambda i: (0, 0)),
    ]
    return pl.pallas_call(
        _post_attn_kernel,
        out_shape=jax.ShapeDtypeStruct((n, hidden), jnp.float32),
        grid=(n // tile_m,),
        in_specs=in_specs,
        out_specs=pl.BlockSpec((tile_m, hidden), lambda i: (i, 0)),
        compiler_params=pltpu.CompilerParams(
            dimension_semantics=("parallel",),
            vmem_limit_bytes=_VMEM_LIMIT),
    )(ctx2d, x2d, p['wo'], p['bo'], p['w1'], p['b1'], p['w2'], p['b2'],
      p['g1'], p['beta1'], p['g2'], p['beta2'])


@functools.partial(jax.jit, static_argnames=("num_heads",))
def transformer_encoder_layer(x, params, *, num_heads):
    """x: [B, S, H] float32 -> [B, S, H] float32 (one encoder layer, eval mode)."""
    B, S, H = x.shape
    assert H % num_heads == 0
    hd = H // num_heads
    N = B * S
    tile_m = _pick_tile(N, _TILE_ROWS)
    tq = _pick_tile(S, _TILE_Q)
    tk = _pick_tile(S, _TILE_KV)

    x2d = x.reshape(N, H)

    # 1) fused QKV projection (bf16 activations handed to the attention kernel).
    q2d, k2d, v2d = qkv_projection(x2d, params['wqkv'], params['bqkv'], tile_m)

    # Head split is layout plumbing done by XLA outside the kernels.
    def split_heads(t):
        return (t.reshape(B, S, num_heads, hd)
                 .transpose(0, 2, 1, 3)
                 .reshape(B * num_heads, S, hd))

    # 2) flash-style attention over (batch*head, q-tiles, kv-tiles).
    ctx = flash_self_attention(split_heads(q2d), split_heads(k2d), split_heads(v2d),
                               tile_q=tq, tile_k=tk)
    ctx2d = (ctx.reshape(B, num_heads, S, hd)
                .transpose(0, 2, 1, 3)
                .reshape(N, H))

    # 3) output projection + residual + LN1 + FFN + residual + LN2 (fused, row-tiled).
    #    dropout_1 / dropout_2 are identity in eval mode.
    out2d = post_attention(ctx2d, x2d, params, tile_m)
    return out2d.reshape(B, S, H)


# ---------------------------------------------------------------------------
# Pure-JAX f32 reference (mirrors the PyTorch module) and parameter init
# ---------------------------------------------------------------------------
def _layer_norm_ref(h, g, b):
    mu = jnp.mean(h, axis=-1, keepdims=True)
    var = jnp.mean(jnp.square(h - mu), axis=-1, keepdims=True)
    return (h - mu) * jax.lax.rsqrt(var + LN_EPS) * g + b


def reference_encoder_layer(x, params, num_heads):
    B, S, H = x.shape
    hd = H // num_heads
    qkv = x @ params['wqkv'].astype(jnp.float32) + params['bqkv']
    q, k, v = jnp.split(qkv, 3, axis=-1)

    def heads(t):
        return t.reshape(B, S, num_heads, hd).transpose(0, 2, 1, 3)

    qh, kh, vh = heads(q), heads(k), heads(v)
    s = jnp.einsum('bhqd,bhkd->bhqk', qh, kh) / math.sqrt(hd)
    p = jax.nn.softmax(s, axis=-1)
    ctx = jnp.einsum('bhqk,bhkd->bhqd', p, vh)
    ctx = ctx.transpose(0, 2, 1, 3).reshape(B, S, H)
    attn = ctx @ params['wo'].astype(jnp.float32) + params['bo']
    h1 = _layer_norm_ref(x + attn, params['g1'], params['beta1'])
    f = jnp.maximum(h1 @ params['w1'].astype(jnp.float32) + params['b1'], 0.0)
    y = f @ params['w2'].astype(jnp.float32) + params['b2']
    return _layer_norm_ref(h1 + y, params['g2'], params['beta2'])


def init_params(key, hidden, fcn_hidden):
    ks = jax.random.split(key, 12)

    def linear(kw, kb, fan_in, fan_out):
        bound = 1.0 / math.sqrt(fan_in)
        w = jax.random.uniform(kw, (fan_in, fan_out), jnp.float32, -bound, bound)
        b = jax.random.uniform(kb, (1, fan_out), jnp.float32, -bound, bound)
        return w, b

    wq, bq = linear(ks[0], ks[1], hidden, hidden)
    wk, bk = linear(ks[2], ks[3], hidden, hidden)
    wv, bv = linear(ks[4], ks[5], hidden, hidden)
    wo, bo = linear(ks[6], ks[7], hidden, hidden)
    w1, b1 = linear(ks[8], ks[9], hidden, fcn_hidden)
    w2, b2 = linear(ks[10], ks[11], fcn_hidden, hidden)

    return {
        # Matmul weights stored in bf16 (MXU operands; half the HBM/VMEM traffic).
        # Biases and LayerNorm parameters stay f32 (VPU/EUP elementwise math in f32).
        'wqkv': jnp.concatenate([wq, wk, wv], axis=1).astype(jnp.bfloat16),
        'bqkv': jnp.concatenate([bq, bk, bv], axis=1),
        'wo': wo.astype(jnp.bfloat16), 'bo': bo,
        'w1': w1.astype(jnp.bfloat16), 'b1': b1,
        'w2': w2.astype(jnp.bfloat16), 'b2': b2,
        'g1': jnp.ones((1, hidden), jnp.float32),
        'beta1': jnp.zeros((1, hidden), jnp.float32),
        'g2': jnp.ones((1, hidden), jnp.float32),
        'beta2': jnp.zeros((1, hidden), jnp.float32),
    }


# ---------------------------------------------------------------------------
if __name__ == "__main__":
    hidden, num_heads, fcn_hidden = 32, 4, 64
    batch, seq = 2, 8

    key = jax.random.PRNGKey(0)
    pkey, xkey = jax.random.split(key)
    params = init_params(pkey, hidden, fcn_hidden)
    x = jax.random.normal(xkey, (batch, seq, hidden), dtype=jnp.float32)

    y = transformer_encoder_layer(x, params, num_heads=num_heads)
    y = jax.block_until_ready(y)

    assert y.shape == (batch, seq, hidden), y.shape
    assert y.dtype == jnp.float32

    y_ref = reference_encoder_layer(x, params, num_heads)
    err = float(jnp.max(jnp.abs(y - y_ref)))
    assert bool(jnp.allclose(y, y_ref, rtol=5e-2, atol=5e-2)), \
        f"mismatch vs f32 reference, max|diff|={err}"

    print("KERNEL_OK")
</pallas_src>

<mosaic_0001>
module attributes {stable_mosaic.version = 11 : i64} {
  func.func @_qkv_proj_kernel(%arg0: i32, %arg1: memref<16x32xf32, #tpu.memory_space<vmem>>, %arg2: memref<32x96xbf16, #tpu.memory_space<vmem>>, %arg3: memref<1x96xf32, #tpu.memory_space<vmem>>, %arg4: memref<16x32xbf16, #tpu.memory_space<vmem>>, %arg5: memref<16x32xbf16, #tpu.memory_space<vmem>>, %arg6: memref<16x32xbf16, #tpu.memory_space<vmem>>) attributes {dimension_semantics = [#tpu.dimension_semantics<parallel>], iteration_bounds = array<i64: 1>, scalar_prefetch = 0 : i64, scratch_operands = 0 : i64, tpu.core_type = #tpu.core_type<tc>, window_params = [{transform_indices = @transform_0, window_bounds = array<i64: 16, 32>}, {pipeline_mode = #tpu.pipeline_mode<synchronous>, transform_indices = @transform_1, window_bounds = array<i64: 32, 96>}, {pipeline_mode = #tpu.pipeline_mode<synchronous>, transform_indices = @transform_2, window_bounds = array<i64: 1, 96>}, {transform_indices = @transform_3, window_bounds = array<i64: 16, 32>}, {transform_indices = @transform_4, window_bounds = array<i64: 16, 32>}, {transform_indices = @transform_5, window_bounds = array<i64: 16, 32>}]} {
    %c0 = arith.constant 0 : index
    %c0_0 = arith.constant 0 : index
    %0 = vector.load %arg1[%c0, %c0_0] : memref<16x32xf32, #tpu.memory_space<vmem>>, vector<16x32xf32>
    %1 = arith.truncf %0 : vector<16x32xf32> to vector<16x32xbf16>
    %c0_1 = arith.constant 0 : index
    %c0_2 = arith.constant 0 : index
    %2 = vector.load %arg2[%c0_1, %c0_2] : memref<32x96xbf16, #tpu.memory_space<vmem>>, vector<32x96xbf16>
    %cst = arith.constant dense<0.000000e+00> : vector<16x96xf32>
    %3 = tpu.matmul %1, %2, %cst {dimension_numbers = #tpu.dot_dimension_numbers<[1], [0], [0], [1], [0, 0, 1, 1], [], []>} : vector<16x32xbf16>, vector<32x96xbf16>, vector<16x96xf32> -> vector<16x96xf32>
    %c0_3 = arith.constant 0 : index
    %c0_4 = arith.constant 0 : index
    %4 = vector.load %arg3[%c0_3, %c0_4] : memref<1x96xf32, #tpu.memory_space<vmem>>, vector<1x96xf32>
    %5 = vector.broadcast %4 : vector<1x96xf32> to vector<16x96xf32>
    %6 = arith.addf %3, %5 : vector<16x96xf32>
    %7 = arith.truncf %6 : vector<16x96xf32> to vector<16x96xbf16>
    %8 = vector.extract_strided_slice %7 {offsets = [0, 0], sizes = [16, 32], strides = [1, 1]} : vector<16x96xbf16> to vector<16x32xbf16>
    %c0_5 = arith.constant 0 : index
    %c0_6 = arith.constant 0 : index
    %9 = vector.load %arg4[%c0_5, %c0_6] : memref<16x32xbf16, #tpu.memory_space<vmem>>, vector<16x32xbf16>
    tpu.vector_store %arg4[%c0_5, %c0_6], %8 {strides = array<i32>} : memref<16x32xbf16, #tpu.memory_space<vmem>>, vector<16x32xbf16>,
    %10 = vector.extract_strided_slice %7 {offsets = [0, 32], sizes = [16, 32], strides = [1, 1]} : vector<16x96xbf16> to vector<16x32xbf16>
    %c0_7 = arith.constant 0 : index
    %c0_8 = arith.constant 0 : index
    %11 = vector.load %arg5[%c0_7, %c0_8] : memref<16x32xbf16, #tpu.memory_space<vmem>>, vector<16x32xbf16>
    tpu.vector_store %arg5[%c0_7, %c0_8], %10 {strides = array<i32>} : memref<16x32xbf16, #tpu.memory_space<vmem>>, vector<16x32xbf16>,
    %12 = vector.extract_strided_slice %7 {offsets = [0, 64], sizes = [16, 32], strides = [1, 1]} : vector<16x96xbf16> to vector<16x32xbf16>
    %c0_9 = arith.constant 0 : index
    %c0_10 = arith.constant 0 : index
    %13 = vector.load %arg6[%c0_9, %c0_10] : memref<16x32xbf16, #tpu.memory_space<vmem>>, vector<16x32xbf16>
    tpu.vector_store %arg6[%c0_9, %c0_10], %12 {strides = array<i32>} : memref<16x32xbf16, #tpu.memory_space<vmem>>, vector<16x32xbf16>,
    return
  }
  func.func @transform_0(%arg0: i32) -> (i32, i32) {
    %c0_i32 = arith.constant 0 : i32
    %c0_i32_0 = arith.constant 0 : i32
    return %arg0, %c0_i32 : i32, i32
  }
  func.func @transform_1(%arg0: i32) -> (i32, i32) {
    %c0_i32 = arith.constant 0 : i32
    %c0_i32_0 = arith.constant 0 : i32
    %c0_i32_1 = arith.constant 0 : i32
    return %c0_i32, %c0_i32_0 : i32, i32
  }
  func.func @transform_2(%arg0: i32) -> (i32, i32) {
    %c0_i32 = arith.constant 0 : i32
    %c0_i32_0 = arith.constant 0 : i32
    %c0_i32_1 = arith.constant 0 : i32
    return %c0_i32, %c0_i32_0 : i32, i32
  }
  func.func @transform_3(%arg0: i32) -> (i32, i32) {
    %c0_i32 = arith.constant 0 : i32
    %c0_i32_0 = arith.constant 0 : i32
    return %arg0, %c0_i32 : i32, i32
  }
  func.func @transform_4(%arg0: i32) -> (i32, i32) {
    %c0_i32 = arith.constant 0 : i32
    %c0_i32_0 = arith.constant 0 : i32
    return %arg0, %c0_i32 : i32, i32
  }
  func.func @transform_5(%arg0: i32) -> (i32, i32) {
    %c0_i32 = arith.constant 0 : i32
    %c0_i32_0 = arith.constant 0 : i32
    return %arg0, %c0_i32 : i32, i32
  }
}

module attributes {stable_mosaic.version = 11 : i64} {
  func.func @_flash_attn_kernel(%arg0: i32, %arg1: i32, %arg2: i32, %arg3: memref<1x8x8xbf16, #tpu.memory_space<vmem>>, %arg4: memref<1x8x8xbf16, #tpu.memory_space<vmem>>, %arg5: memref<1x8x8xbf16, #tpu.memory_space<vmem>>, %arg6: memref<1x8x8xf32, #tpu.memory_space<vmem>>, %arg7: memref<8x1xf32, #tpu.memory_space<vmem>>, %arg8: memref<8x1xf32, #tpu.memory_space<vmem>>, %arg9: memref<8x8xf32, #tpu.memory_space<vmem>>) attributes {dimension_semantics = [#tpu.dimension_semantics<parallel>, #tpu.dimension_semantics<parallel>, #tpu.dimension_semantics<arbitrary>], iteration_bounds = array<i64: 8, 1, 1>, scalar_prefetch = 0 : i64, scratch_operands = 3 : i64, tpu.core_type = #tpu.core_type<tc>, window_params = [{transform_indices = @transform_0, window_bounds = array<i64: 1, 8, 8>}, {transform_indices = @transform_1, window_bounds = array<i64: 1, 8, 8>}, {transform_indices = @transform_2, window_bounds = array<i64: 1, 8, 8>}, {transform_indices = @transform_3, window_bounds = array<i64: 1, 8, 8>}]} {
    %c0_i32 = arith.constant 0 : i32
    %0 = arith.cmpi eq, %arg2, %c0_i32 : i32
    %1 = arith.extui %0 : i1 to i32
    %c0_i32_0 = arith.constant 0 : i32
    %2 = arith.cmpi ne, %1, %c0_i32_0 : i32
    scf.if %2 {
      %cst_27 = arith.constant 0xFF800000 : f32
      %38 = vector.broadcast %cst_27 : f32 to vector<8x1xf32>
      %c0_28 = arith.constant 0 : index
      %c0_29 = arith.constant 0 : index
      %39 = vector.load %arg7[%c0_28, %c0_29] : memref<8x1xf32, #tpu.memory_space<vmem>>, vector<8x1xf32>
      tpu.vector_store %arg7[%c0_28, %c0_29], %38 {strides = array<i32>} : memref<8x1xf32, #tpu.memory_space<vmem>>, vector<8x1xf32>,
      %cst_30 = arith.constant 0.000000e+00 : f32
      %40 = vector.broadcast %cst_30 : f32 to vector<8x1xf32>
      %c0_31 = arith.constant 0 : index
      %c0_32 = arith.constant 0 : index
      %41 = vector.load %arg8[%c0_31, %c0_32] : memref<8x1xf32, #tpu.memory_space<vmem>>, vector<8x1xf32>
      tpu.vector_store %arg8[%c0_31, %c0_32], %40 {strides = array<i32>} : memref<8x1xf32, #tpu.memory_space<vmem>>, vector<8x1xf32>,
      %cst_33 = arith.constant 0.000000e+00 : f32
      %42 = vector.broadcast %cst_33 : f32 to vector<8x8xf32>
      %c0_34 = arith.constant 0 : index
      %c0_35 = arith.constant 0 : index
      %43 = vector.load %arg9[%c0_34, %c0_35] : memref<8x8xf32, #tpu.memory_space<vmem>>, vector<8x8xf32>
      tpu.vector_store %arg9[%c0_34, %c0_35], %42 {strides = array<i32>} : memref<8x8xf32, #tpu.memory_space<vmem>>, vector<8x8xf32>,
    } else {
    }
    %c0 = arith.constant 0 : index
    %c0_1 = arith.constant 0 : index
    %c0_2 = arith.constant 0 : index
    %3 = vector.load %arg3[%c0, %c0_1, %c0_2] : memref<1x8x8xbf16, #tpu.memory_space<vmem>>, vector<1x8x8xbf16>
    %4 = vector.shape_cast %3 : vector<1x8x8xbf16> to vector<8x8xbf16>
    %c0_3 = arith.constant 0 : index
    %c0_4 = arith.constant 0 : index
    %c0_5 = arith.constant 0 : index
    %5 = vector.load %arg4[%c0_3, %c0_4, %c0_5] : memref<1x8x8xbf16, #tpu.memory_space<vmem>>, vector<1x8x8xbf16>
    %6 = vector.shape_cast %5 : vector<1x8x8xbf16> to vector<8x8xbf16>
    %c0_6 = arith.constant 0 : index
    %c0_7 = arith.constant 0 : index
    %c0_8 = arith.constant 0 : index
    %7 = vector.load %arg5[%c0_6, %c0_7, %c0_8] : memref<1x8x8xbf16, #tpu.memory_space<vmem>>, vector<1x8x8xbf16>
    %8 = vector.shape_cast %7 : vector<1x8x8xbf16> to vector<8x8xbf16>
    %cst = arith.constant dense<0.000000e+00> : vector<8x8xf32>
    %9 = tpu.matmul %4, %6, %cst {dimension_numbers = #tpu.dot_dimension_numbers<[1], [1], [0], [0], [0, 0, 1, 0], [], []>} : vector<8x8xbf16>, vector<8x8xbf16>, vector<8x8xf32> -> vector<8x8xf32>
    %cst_9 = arith.constant 0.353553385 : f32
    %10 = vector.broadcast %cst_9 : f32 to vector<8x8xf32>
    %11 = arith.mulf %9, %10 : vector<8x8xf32>
    %c0_10 = arith.constant 0 : index
    %c0_11 = arith.constant 0 : index
    %12 = vector.load %arg7[%c0_10, %c0_11] : memref<8x1xf32, #tpu.memory_space<vmem>>, vector<8x1xf32>
    %cst_12 = arith.constant dense<0xFF800000> : vector<8xf32>
    %13 = vector.multi_reduction <maximumf>, %11, %cst_12 [1] : vector<8x8xf32> to vector<8xf32>
    %14 = vector.shape_cast %13 : vector<8xf32> to vector<8x1xf32>
    %15 = arith.maximumf %12, %14 : vector<8x1xf32>
    %16 = arith.subf %12, %15 : vector<8x1xf32>
    %17 = math.exp %16 : vector<8x1xf32>
    %18 = vector.broadcast %15 : vector<8x1xf32> to vector<8x8xf32>
    %19 = arith.subf %11, %18 : vector<8x8xf32>
    %20 = math.exp %19 : vector<8x8xf32>
    %c0_13 = arith.constant 0 : index
    %c0_14 = arith.constant 0 : index
    %21 = vector.load %arg8[%c0_13, %c0_14] : memref<8x1xf32, #tpu.memory_space<vmem>>, vector<8x1xf32>
    %22 = arith.mulf %17, %21 : vector<8x1xf32>
    %cst_15 = arith.constant dense<0.000000e+00> : vector<8xf32>
    %23 = vector.multi_reduction <add>, %20, %cst_15 [1] : vector<8x8xf32> to vector<8xf32>
    %24 = vector.shape_cast %23 : vector<8xf32> to vector<8x1xf32>
    %25 = arith.addf %22, %24 : vector<8x1xf32>
    %c0_16 = arith.constant 0 : index
    %c0_17 = arith.constant 0 : index
    %26 = vector.load %arg8[%c0_16, %c0_17] : memref<8x1xf32, #tpu.memory_space<vmem>>, vector<8x1xf32>
    tpu.vector_store %arg8[%c0_16, %c0_17], %25 {strides = array<i32>} : memref<8x1xf32, #tpu.memory_space<vmem>>, vector<8x1xf32>,
    %c0_18 = arith.constant 0 : index
    %c0_19 = arith.constant 0 : index
    %27 = vector.load %arg9[%c0_18, %c0_19] : memref<8x8xf32, #tpu.memory_space<vmem>>, vector<8x8xf32>
    %28 = vector.broadcast %17 : vector<8x1xf32> to vector<8x8xf32>
    %29 = arith.mulf %28, %27 : vector<8x8xf32>
    %30 = arith.truncf %20 : vector<8x8xf32> to vector<8x8xbf16>
    %cst_20 = arith.constant dense<0.000000e+00> : vector<8x8xf32>
    %31 = tpu.matmul %30, %8, %cst_20 {dimension_numbers = #tpu.dot_dimension_numbers<[1], [0], [0], [1], [0, 0, 1, 1], [], []>} : vector<8x8xbf16>, vector<8x8xbf16>, vector<8x8xf32> -> vector<8x8xf32>
    %32 = arith.addf %29, %31 : vector<8x8xf32>
    %c0_21 = arith.constant 0 : index
    %c0_22 = arith.constant 0 : index
    %33 = vector.load %arg9[%c0_21, %c0_22] : memref<8x8xf32, #tpu.memory_space<vmem>>, vector<8x8xf32>
    tpu.vector_store %arg9[%c0_21, %c0_22], %32 {strides = array<i32>} : memref<8x8xf32, #tpu.memory_space<vmem>>, vector<8x8xf32>,
    %c0_23 = arith.constant 0 : index
    %c0_24 = arith.constant 0 : index
    %34 = vector.load %arg7[%c0_23, %c0_24] : memref<8x1xf32, #tpu.memory_space<vmem>>, vector<8x1xf32>
    tpu.vector_store %arg7[%c0_23, %c0_24], %15 {strides = array<i32>} : memref<8x1xf32, #tpu.memory_space<vmem>>, vector<8x1xf32>,
    %c0_i32_25 = arith.constant 0 : i32
    %35 = arith.cmpi eq, %arg2, %c0_i32_25 : i32
    %36 = arith.extui %35 : i1 to i32
    %c0_i32_26 = arith.constant 0 : i32
    %37 = arith.cmpi ne, %36, %c0_i32_26 : i32
    scf.if %37 {
      %c0_27 = arith.constant 0 : index
      %c0_28 = arith.constant 0 : index
      %38 = vector.load %arg8[%c0_27, %c0_28] : memref<8x1xf32, #tpu.memory_space<vmem>>, vector<8x1xf32>
      %39 = tpu.reciprocal %38 {approx = true} : vector<8x1xf32> -> vector<8x1xf32>
      %c0_29 = arith.constant 0 : index
      %c0_30 = arith.constant 0 : index
      %40 = vector.load %arg9[%c0_29, %c0_30] : memref<8x8xf32, #tpu.memory_space<vmem>>, vector<8x8xf32>
      %41 = vector.broadcast %39 : vector<8x1xf32> to vector<8x8xf32>
      %42 = arith.mulf %40, %41 : vector<8x8xf32>
      %c0_31 = arith.constant 0 : index
      %c0_32 = arith.constant 0 : index
      %c0_33 = arith.constant 0 : index
      %43 = vector.load %arg6[%c0_31, %c0_32, %c0_33] : memref<1x8x8xf32, #tpu.memory_space<vmem>>, vector<1x8x8xf32>
      %44 = vector.shape_cast %43 : vector<1x8x8xf32> to vector<8x8xf32>
      %45 = vector.shape_cast %42 : vector<8x8xf32> to vector<1x8x8xf32>
      tpu.vector_store %arg6[%c0_31, %c0_32, %c0_33], %45 {strides = array<i32>} : memref<1x8x8xf32, #tpu.memory_space<vmem>>, vector<1x8x8xf32>,
    } else {
    }
    return
  }
  func.func @transform_0(%arg0: i32, %arg1: i32, %arg2: i32) -> (i32, i32, i32) {
    %c0_i32 = arith.constant 0 : i32
    %c0_i32_0 = arith.constant 0 : i32
    return %arg0, %arg1, %c0_i32 : i32, i32, i32
  }
  func.func @transform_1(%arg0: i32, %arg1: i32, %arg2: i32) -> (i32, i32, i32) {
    %c0_i32 = arith.constant 0 : i32
    %c0_i32_0 = arith.constant 0 : i32
    return %arg0, %arg2, %c0_i32 : i32, i32, i32
  }
  func.func @transform_2(%arg0: i32, %arg1: i32, %arg2: i32) -> (i32, i32, i32) {
    %c0_i32 = arith.constant 0 : i32
    %c0_i32_0 = arith.constant 0 : i32
    return %arg0, %arg2, %c0_i32 : i32, i32, i32
  }
  func.func @transform_3(%arg0: i32, %arg1: i32, %arg2: i32) -> (i32, i32, i32) {
    %c0_i32 = arith.constant 0 : i32
    %c0_i32_0 = arith.constant 0 : i32
    return %arg0, %arg1, %c0_i32 : i32, i32, i32
  }
}

module attributes {stable_mosaic.version = 11 : i64} {
  func.func @_post_attn_kernel(%arg0: i32, %arg1: memref<16x32xf32, #tpu.memory_space<vmem>>, %arg2: memref<16x32xf32, #tpu.memory_space<vmem>>, %arg3: memref<32x32xbf16, #tpu.memory_space<vmem>>, %arg4: memref<1x32xf32, #tpu.memory_space<vmem>>, %arg5: memref<32x64xbf16, #tpu.memory_space<vmem>>, %arg6: memref<1x64xf32, #tpu.memory_space<vmem>>, %arg7: memref<64x32xbf16, #tpu.memory_space<vmem>>, %arg8: memref<1x32xf32, #tpu.memory_space<vmem>>, %arg9: memref<1x32xf32, #tpu.memory_space<vmem>>, %arg10: memref<1x32xf32, #tpu.memory_space<vmem>>, %arg11: memref<1x32xf32, #tpu.memory_space<vmem>>, %arg12: memref<1x32xf32, #tpu.memory_space<vmem>>, %arg13: memref<16x32xf32, #tpu.memory_space<vmem>>) attributes {dimension_semantics = [#tpu.dimension_semantics<parallel>], iteration_bounds = array<i64: 1>, scalar_prefetch = 0 : i64, scratch_operands = 0 : i64, tpu.core_type = #tpu.core_type<tc>, window_params = [{transform_indices = @transform_0, window_bounds = array<i64: 16, 32>}, {transform_indices = @transform_1, window_bounds = array<i64: 16, 32>}, {pipeline_mode = #tpu.pipeline_mode<synchronous>, transform_indices = @transform_2, window_bounds = array<i64: 32, 32>}, {pipeline_mode = #tpu.pipeline_mode<synchronous>, transform_indices = @transform_3, window_bounds = array<i64: 1, 32>}, {pipeline_mode = #tpu.pipeline_mode<synchronous>, transform_indices = @transform_4, window_bounds = array<i64: 32, 64>}, {pipeline_mode = #tpu.pipeline_mode<synchronous>, transform_indices = @transform_5, window_bounds = array<i64: 1, 64>}, {pipeline_mode = #tpu.pipeline_mode<synchronous>, transform_indices = @transform_6, window_bounds = array<i64: 64, 32>}, {pipeline_mode = #tpu.pipeline_mode<synchronous>, transform_indices = @transform_7, window_bounds = array<i64: 1, 32>}, {pipeline_mode = #tpu.pipeline_mode<synchronous>, transform_indices = @transform_8, window_bounds = array<i64: 1, 32>}, {pipeline_mode = #tpu.pipeline_mode<synchronous>, transform_indices = @transform_9, window_bounds = array<i64: 1, 32>}, {pipeline_mode = #tpu.pipeline_mode<synchronous>, transform_indices = @transform_10, window_bounds = array<i64: 1, 32>}, {pipeline_mode = #tpu.pipeline_mode<synchronous>, transform_indices = @transform_11, window_bounds = array<i64: 1, 32>}, {transform_indices = @transform_12, window_bounds = array<i64: 16, 32>}]} {
    %c0 = arith.constant 0 : index
    %c0_0 = arith.constant 0 : index
    %0 = vector.load %arg1[%c0, %c0_0] : memref<16x32xf32, #tpu.memory_space<vmem>>, vector<16x32xf32>
    %c0_1 = arith.constant 0 : index
    %c0_2 = arith.constant 0 : index
    %1 = vector.load %arg2[%c0_1, %c0_2] : memref<16x32xf32, #tpu.memory_space<vmem>>, vector<16x32xf32>
    %2 = arith.truncf %0 : vector<16x32xf32> to vector<16x32xbf16>
    %c0_3 = arith.constant 0 : index
    %c0_4 = arith.constant 0 : index
    %3 = vector.load %arg3[%c0_3, %c0_4] : memref<32x32xbf16, #tpu.memory_space<vmem>>, vector<32x32xbf16>
    %cst = arith.constant dense<0.000000e+00> : vector<16x32xf32>
    %4 = tpu.matmul %2, %3, %cst {dimension_numbers = #tpu.dot_dimension_numbers<[1], [0], [0], [1], [0, 0, 1, 1], [], []>} : vector<16x32xbf16>, vector<32x32xbf16>, vector<16x32xf32> -> vector<16x32xf32>
    %c0_5 = arith.constant 0 : index
    %c0_6 = arith.constant 0 : index
    %5 = vector.load %arg4[%c0_5, %c0_6] : memref<1x32xf32, #tpu.memory_space<vmem>>, vector<1x32xf32>
    %6 = vector.broadcast %5 : vector<1x32xf32> to vector<16x32xf32>
    %7 = arith.addf %4, %6 : vector<16x32xf32>
    %8 = arith.addf %1, %7 : vector<16x32xf32>
    %cst_7 = arith.constant dense<0.000000e+00> : vector<16xf32>
    %9 = vector.multi_reduction <add>, %8, %cst_7 [1] : vector<16x32xf32> to vector<16xf32>
    %10 = vector.shape_cast %9 : vector<16xf32> to vector<16x1xf32>
    %cst_8 = arith.constant 3.200000e+01 : f32
    %11 = vector.broadcast %cst_8 : f32 to vector<16x1xf32>
    %12 = arith.divf %10, %11 : vector<16x1xf32>
    %13 = vector.broadcast %12 : vector<16x1xf32> to vector<16x32xf32>
    %14 = arith.subf %8, %13 : vector<16x32xf32>
    %15 = arith.mulf %14, %14 : vector<16x32xf32>
    %cst_9 = arith.constant dense<0.000000e+00> : vector<16xf32>
    %16 = vector.multi_reduction <add>, %15, %cst_9 [1] : vector<16x32xf32> to vector<16xf32>
    %17 = vector.shape_cast %16 : vector<16xf32> to vector<16x1xf32>
    %cst_10 = arith.constant 3.200000e+01 : f32
    %18 = vector.broadcast %cst_10 : f32 to vector<16x1xf32>
    %19 = arith.divf %17, %18 : vector<16x1xf32>
    %20 = vector.broadcast %12 : vector<16x1xf32> to vector<16x32xf32>
    %21 = arith.subf %8, %20 : vector<16x32xf32>
    %cst_11 = arith.constant 9.99999974E-6 : f32
    %22 = vector.broadcast %cst_11 : f32 to vector<16x1xf32>
    %23 = arith.addf %19, %22 : vector<16x1xf32>
    %24 = math.rsqrt %23 : vector<16x1xf32>
    %25 = vector.broadcast %24 : vector<16x1xf32> to vector<16x32xf32>
    %26 = arith.mulf %21, %25 : vector<16x32xf32>
    %c0_12 = arith.constant 0 : index
    %c0_13 = arith.constant 0 : index
    %27 = vector.load %arg9[%c0_12, %c0_13] : memref<1x32xf32, #tpu.memory_space<vmem>>, vector<1x32xf32>
    %28 = vector.broadcast %27 : vector<1x32xf32> to vector<16x32xf32>
    %29 = arith.mulf %26, %28 : vector<16x32xf32>
    %c0_14 = arith.constant 0 : index
    %c0_15 = arith.constant 0 : index
    %30 = vector.load %arg10[%c0_14, %c0_15] : memref<1x32xf32, #tpu.memory_space<vmem>>, vector<1x32xf32>
    %31 = vector.broadcast %30 : vector<1x32xf32> to vector<16x32xf32>
    %32 = arith.addf %29, %31 : vector<16x32xf32>
    %33 = arith.truncf %32 : vector<16x32xf32> to vector<16x32xbf16>
    %c0_16 = arith.constant 0 : index
    %c0_17 = arith.constant 0 : index
    %34 = vector.load %arg5[%c0_16, %c0_17] : memref<32x64xbf16, #tpu.memory_space<vmem>>, vector<32x64xbf16>
    %cst_18 = arith.constant dense<0.000000e+00> : vector<16x64xf32>
    %35 = tpu.matmul %33, %34, %cst_18 {dimension_numbers = #tpu.dot_dimension_numbers<[1], [0], [0], [1], [0, 0, 1, 1], [], []>} : vector<16x32xbf16>, vector<32x64xbf16>, vector<16x64xf32> -> vector<16x64xf32>
    %c0_19 = arith.constant 0 : index
    %c0_20 = arith.constant 0 : index
    %36 = vector.load %arg6[%c0_19, %c0_20] : memref<1x64xf32, #tpu.memory_space<vmem>>, vector<1x64xf32>
    %37 = vector.broadcast %36 : vector<1x64xf32> to vector<16x64xf32>
    %38 = arith.addf %35, %37 : vector<16x64xf32>
    %cst_21 = arith.constant 0.000000e+00 : f32
    %39 = vector.broadcast %cst_21 : f32 to vector<16x64xf32>
    %40 = arith.maximumf %38, %39 : vector<16x64xf32>
    %41 = arith.truncf %40 : vector<16x64xf32> to vector<16x64xbf16>
    %c0_22 = arith.constant 0 : index
    %c0_23 = arith.constant 0 : index
    %42 = vector.load %arg7[%c0_22, %c0_23] : memref<64x32xbf16, #tpu.memory_space<vmem>>, vector<64x32xbf16>
    %cst_24 = arith.constant dense<0.000000e+00> : vector<16x32xf32>
    %43 = tpu.matmul %41, %42, %cst_24 {dimension_numbers = #tpu.dot_dimension_numbers<[1], [0], [0], [1], [0, 0, 1, 1], [], []>} : vector<16x64xbf16>, vector<64x32xbf16>, vector<16x32xf32> -> vector<16x32xf32>
    %c0_25 = arith.constant 0 : index
    %c0_26 = arith.constant 0 : index
    %44 = vector.load %arg8[%c0_25, %c0_26] : memref<1x32xf32, #tpu.memory_space<vmem>>, vector<1x32xf32>
    %45 = vector.broadcast %44 : vector<1x32xf32> to vector<16x32xf32>
    %46 = arith.addf %43, %45 : vector<16x32xf32>
    %47 = arith.addf %32, %46 : vector<16x32xf32>
    %cst_27 = arith.constant dense<0.000000e+00> : vector<16xf32>
    %48 = vector.multi_reduction <add>, %47, %cst_27 [1] : vector<16x32xf32> to vector<16xf32>
    %49 = vector.shape_cast %48 : vector<16xf32> to vector<16x1xf32>
    %cst_28 = arith.constant 3.200000e+01 : f32
    %50 = vector.broadcast %cst_28 : f32 to vector<16x1xf32>
    %51 = arith.divf %49, %50 : vector<16x1xf32>
    %52 = vector.broadcast %51 : vector<16x1xf32> to vector<16x32xf32>
    %53 = arith.subf %47, %52 : vector<16x32xf32>
    %54 = arith.mulf %53, %53 : vector<16x32xf32>
    %cst_29 = arith.constant dense<0.000000e+00> : vector<16xf32>
    %55 = vector.multi_reduction <add>, %54, %cst_29 [1] : vector<16x32xf32> to vector<16xf32>
    %56 = vector.shape_cast %55 : vector<16xf32> to vector<16x1xf32>
    %cst_30 = arith.constant 3.200000e+01 : f32
    %57 = vector.broadcast %cst_30 : f32 to vector<16x1xf32>
    %58 = arith.divf %56, %57 : vector<16x1xf32>
    %59 = vector.broadcast %51 : vector<16x1xf32> to vector<16x32xf32>
    %60 = arith.subf %47, %59 : vector<16x32xf32>
    %cst_31 = arith.constant 9.99999974E-6 : f32
    %61 = vector.broadcast %cst_31 : f32 to vector<16x1xf32>
    %62 = arith.addf %58, %61 : vector<16x1xf32>
    %63 = math.rsqrt %62 : vector<16x1xf32>
    %64 = vector.broadcast %63 : vector<16x1xf32> to vector<16x32xf32>
    %65 = arith.mulf %60, %64 : vector<16x32xf32>
    %c0_32 = arith.constant 0 : index
    %c0_33 = arith.constant 0 : index
    %66 = vector.load %arg11[%c0_32, %c0_33] : memref<1x32xf32, #tpu.memory_space<vmem>>, vector<1x32xf32>
    %67 = vector.broadcast %66 : vector<1x32xf32> to vector<16x32xf32>
    %68 = arith.mulf %65, %67 : vector<16x32xf32>
    %c0_34 = arith.constant 0 : index
    %c0_35 = arith.constant 0 : index
    %69 = vector.load %arg12[%c0_34, %c0_35] : memref<1x32xf32, #tpu.memory_space<vmem>>, vector<1x32xf32>
    %70 = vector.broadcast %69 : vector<1x32xf32> to vector<16x32xf32>
    %71 = arith.addf %68, %70 : vector<16x32xf32>
    %c0_36 = arith.constant 0 : index
    %c0_37 = arith.constant 0 : index
    %72 = vector.load %arg13[%c0_36, %c0_37] : memref<16x32xf32, #tpu.memory_space<vmem>>, vector<16x32xf32>
    tpu.vector_store %arg13[%c0_36, %c0_37], %71 {strides = array<i32>} : memref<16x32xf32, #tpu.memory_space<vmem>>, vector<16x32xf32>,
    return
  }
  func.func @transform_0(%arg0: i32) -> (i32, i32) {
    %c0_i32 = arith.constant 0 : i32
    %c0_i32_0 = arith.constant 0 : i32
    return %arg0, %c0_i32 : i32, i32
  }
  func.func @transform_1(%arg0: i32) -> (i32, i32) {
    %c0_i32 = arith.constant 0 : i32
    %c0_i32_0 = arith.constant 0 : i32
    return %arg0, %c0_i32 : i32, i32
  }
  func.func @transform_2(%arg0: i32) -> (i32, i32) {
    %c0_i32 = arith.constant 0 : i32
    %c0_i32_0 = arith.constant 0 : i32
    %c0_i32_1 = arith.constant 0 : i32
    return %c0_i32, %c0_i32_0 : i32, i32
  }
  func.func @transform_3(%arg0: i32) -> (i32, i32) {
    %c0_i32 = arith.constant 0 : i32
    %c0_i32_0 = arith.constant 0 : i32
    %c0_i32_1 = arith.constant 0 : i32
    return %c0_i32, %c0_i32_0 : i32, i32
  }
  func.func @transform_4(%arg0: i32) -> (i32, i32) {
    %c0_i32 = arith.constant 0 : i32
    %c0_i32_0 = arith.constant 0 : i32
    %c0_i32_1 = arith.constant 0 : i32
    return %c0_i32, %c0_i32_0 : i32, i32
  }
  func.func @transform_5(%arg0: i32) -> (i32, i32) {
    %c0_i32 = arith.constant 0 : i32
    %c0_i32_0 = arith.constant 0 : i32
    %c0_i32_1 = arith.constant 0 : i32
    return %c0_i32, %c0_i32_0 : i32, i32
  }
  func.func @transform_6(%arg0: i32) -> (i32, i32) {
    %c0_i32 = arith.constant 0 : i32
    %c0_i32_0 = arith.constant 0 : i32
    %c0_i32_1 = arith.constant 0 : i32
    return %c0_i32, %c0_i32_0 : i32, i32
  }
  func.func @transform_7(%arg0: i32) -> (i32, i32) {
    %c0_i32 = arith.constant 0 : i32
    %c0_i32_0 = arith.constant 0 : i32
    %c0_i32_1 = arith.constant 0 : i32
    return %c0_i32, %c0_i32_0 : i32, i32
  }
  func.func @transform_8(%arg0: i32) -> (i32, i32) {
    %c0_i32 = arith.constant 0 : i32
    %c0_i32_0 = arith.constant 0 : i32
    %c0_i32_1 = arith.constant 0 : i32
    return %c0_i32, %c0_i32_0 : i32, i32
  }
  func.func @transform_9(%arg0: i32) -> (i32, i32) {
    %c0_i32 = arith.constant 0 : i32
    %c0_i32_0 = arith.constant 0 : i32
    %c0_i32_1 = arith.constant 0 : i32
    return %c0_i32, %c0_i32_0 : i32, i32
  }
  func.func @transform_10(%arg0: i32) -> (i32, i32) {
    %c0_i32 = arith.constant 0 : i32
    %c0_i32_0 = arith.constant 0 : i32
    %c0_i32_1 = arith.constant 0 : i32
    return %c0_i32, %c0_i32_0 : i32, i32
  }
  func.func @transform_11(%arg0: i32) -> (i32, i32) {
    %c0_i32 = arith.constant 0 : i32
    %c0_i32_0 = arith.constant 0 : i32
    %c0_i32_1 = arith.constant 0 : i32
    return %c0_i32, %c0_i32_0 : i32, i32
  }
  func.func @transform_12(%arg0: i32) -> (i32, i32) {
    %c0_i32 = arith.constant 0 : i32
    %c0_i32_0 = arith.constant 0 : i32
    return %arg0, %c0_i32 : i32, i32
  }
}

</mosaic_0001>

<llo_original>
// kernel: transformer_encoder_layer.3
$region0: #{transformer_encoder_layer.3}
  #allocation0 [shape = 'u32[]', space=smem, size = 0x4, offset = 0x4, fixed_abs, tag = 'smem constant byte address 0x4 - core index']
  #allocation1 [shape = 'u32[72,128]{1,0:T(1,128)}', space=vmem, size = 0x9000, scoped, tag = 'internal scratch']
  %s0 = inlined_call_operand.hbm [shape: f32[16,32], index: 0, kind: input, shape index: {}]
  %s1 = inlined_call_operand.hbm [shape: bf16[32,96], index: 1, kind: input, shape index: {}]
  %s2 = inlined_call_operand.vmem [shape: f32[1,96], index: 2, kind: input, shape index: {}]
  %s3 = inlined_call_operand.vmem [shape: bf16[16,32], index: 3, kind: output, shape index: {0}]
  %s4 = inlined_call_operand.vmem [shape: bf16[16,32], index: 4, kind: output, shape index: {1}]
  %s5 = inlined_call_operand.vmem [shape: bf16[16,32], index: 5, kind: output, shape index: {2}]
  %6 = xla_tuple %s3, %s4, %s5
  %s7 = sld [smem:[#allocation0]]
  $region46: #{transformer_encoder_layer.3} parent=0
    _
  %s9 = ssub.s32 1, %s7
  %s10 = scalar_select 0, %s9, %s7
  $region1: #{transformer_encoder_layer.3} parent=0
    #allocation2 [shape = 'u8[8192]{0}', space=vmem, size = 0x2000, scoped, tag = 'input window, operand 0, single buffered']
    #allocation3 [shape = 's32[1]{0}', space=sflag, size = 0x4, scoped, tag = 'scoped memory for transformer_encoder_layer.3']
    #allocation4 [shape = 'u8[8192]{0}', space=vmem, size = 0x2000, scoped, tag = 'input window, operand 1, single buffered']
    #allocation5 [shape = 's32[1]{0}', space=sflag, size = 0x4, scoped, tag = 'scoped memory for transformer_encoder_layer.3']
    %11 = vsyncpa [#allocation3], 0
    %12 = vsyncpa [#allocation5], 0
    // Predicated region
    $region2: #{transformer_encoder_layer.3} parent=1 // pred_check
      _
    $region3: #{transformer_encoder_layer.3} parent=1 // pred_check_branch
      %14 = sbr.rel (0) target = $region5
    $region4: #{transformer_encoder_layer.3} parent=1 // pred_region
      %16 = vsyncadd [#allocation3], 0
      %s17 = sshll.u32 %s0, 4
      %s18 = int_to_ptr.hbm [resolvable:$true] %s17
      %s19 = sshll.u32 [#allocation2], 4
      %s20 = int_to_ptr.vmem [resolvable:$true] %s19
      %25 = dma.hbm_to_vmem [thread:$0]  %s18, 256, %s20, [#allocation3], 128, 128, 8
    $region5: #{transformer_encoder_layer.3} parent=1 // pred_fallthru
      _
    // Predicated region
    $region6: #{transformer_encoder_layer.3} parent=1 // pred_check
      _
    $region7: #{transformer_encoder_layer.3} parent=1 // pred_check_branch
      %27 = sbr.rel (0) target = $region9
    $region8: #{transformer_encoder_layer.3} parent=1 // pred_region
      %29 = vsyncadd [#allocation5], 0
      %s30 = sshll.u32 %s1, 4
      %s31 = int_to_ptr.hbm [resolvable:$true] %s30
      %s32 = sshll.u32 [#allocation4], 4
      %s33 = int_to_ptr.vmem [resolvable:$true] %s32
      %38 = dma.hbm_to_vmem [thread:$0]  %s31, 256, %s33, [#allocation5], 64, 64, 4
    $region9: #{transformer_encoder_layer.3} parent=1 // pred_fallthru
      _
    // Predicated region
    $region10: #{transformer_encoder_layer.3} parent=1 // pred_check
      _
    $region11: #{transformer_encoder_layer.3} parent=1 // pred_check_branch
      %40 = sbr.rel (0) target = $region13
    $region12: #{transformer_encoder_layer.3} parent=1 // pred_region
      _
    $region13: #{transformer_encoder_layer.3} parent=1 // pred_fallthru
      _
    // Predicated region
    $region14: #{transformer_encoder_layer.3} parent=1 // pred_check
      _
    $region15: #{transformer_encoder_layer.3} parent=1 // pred_check_branch
      %42 = sbr.rel (0) target = $region17
    $region16: #{transformer_encoder_layer.3} parent=1 // pred_region
      %44 = dma.done [#allocation3], 256
    $region17: #{transformer_encoder_layer.3} parent=1 // pred_fallthru
      _
    // Predicated region
    $region18: #{transformer_encoder_layer.3} parent=1 // pred_check
      _
    $region19: #{transformer_encoder_layer.3} parent=1 // pred_check_branch
      %46 = sbr.rel (0) target = $region21
    $region20: #{transformer_encoder_layer.3} parent=1 // pred_region
      %48 = dma.done [#allocation5], 256
    $region21: #{transformer_encoder_layer.3} parent=1 // pred_fallthru
      _
    %v50 = vld [vmem:[#allocation2] sm:$0xff]
    %v51 = vld [vmem:[#allocation2 + $0x8] sm:$0xff]
    %v52 = vpack.c.bf16 %v51, %v50
    %v53 = vld [vmem:[#allocation4] sm:$0xf]
    %v54 = vld [vmem:[#allocation4 + $0x4] sm:$0xf]
    %v55 = vld [vmem:[#allocation4 + $0x8] sm:$0xf]
    %v56 = vld [vmem:[#allocation4 + $0xc] sm:$0xf]
    %v57 = vld [vmem:[%s2] sm:$0x1]
    %v59 = vperm.slane %v57, 0
    %v65 = vunpack.c.l.b16 %v53
    %v66 = vunpack.c.l.b16 %v54
    %v67 = vunpack.c.l.b16 %v55
    %v68 = vunpack.c.l.b16 %v56
    %v69 = vpack.c.b16 %v66, %v65
    %v70 = vpack.c.b16 %v68, %v67
    %vm73 = vcmask 261120
    %v75 = vsel %vm73, %v52, 0
    %77 = vmatpush.bf16.msra.mxu0 0
    %78 = vmatpush.bf16.msra.mxu0 0
    %79 = vmatpush.bf16.msra.mxu0 0
    %80 = vmatpush.bf16.msra.mxu0 0
    %81 = vmatpush.bf16.msra.mxu0 0
    %82 = vmatpush.bf16.msra.mxu0 0
    %83 = vmatpush.bf16.msra.mxu0 %v70
    %84 = vmatpush.bf16.msra.mxu0 %v69
    %85 = vmatmul.bf16.gmra.mxu0 %v75
    %v86 = vpop.f32.mrf.mxu0
    %v87 = vadd.f32 %v59, %v86
    %v88 = vpop.f32.mrf.mxu0
    %v89 = vadd.f32 %v59, %v88
    %90 = vdwg.mxu0
    %v91 = vpack.c.bf16 %v87, %v87
    %v92 = vpack.c.bf16 %v89, %v89
    %vm93 = vcmask 257024
    %94 = vst.msk [vmem:[%s3] sm:$0xf] %vm93, %v91
    %95 = vst.msk [vmem:[%s3 + $0x4] sm:$0xf] %vm93, %v92
    %98 = vrot.lane.b32.xlu0 %v91, 96
    %v99 = vpop.permute.xlu0 %98
    %100 = vrot.lane.b32.xlu0 %v92, 96
    %v101 = vpop.permute.xlu0 %100
    %104 = vst.msk [vmem:[%s4] sm:$0xf] %vm93, %v99
    %105 = vst.msk [vmem:[%s4 + $0x4] sm:$0xf] %vm93, %v101
    %106 = vrot.lane.b32.xlu0 %v91, 64
    %v107 = vpop.permute.xlu0 %106
    %108 = vrot.lane.b32.xlu0 %v92, 64
    %v109 = vpop.permute.xlu0 %108
    %112 = vst.msk [vmem:[%s5] sm:$0xf] %vm93, %v107
    %113 = vst.msk [vmem:[%s5 + $0x4] sm:$0xf] %vm93, %v109
    // Predicated region
    $region22: #{transformer_encoder_layer.3} parent=1 // pred_check
      _
    $region23: #{transformer_encoder_layer.3} parent=1 // pred_check_branch
      %115 = sbr.rel (0) target = $region25
    $region24: #{transformer_encoder_layer.3} parent=1 // pred_region
      _
    $region25: #{transformer_encoder_layer.3} parent=1 // pred_fallthru
      _
    // Predicated region
    $region26: #{transformer_encoder_layer.3} parent=1 // pred_check
      _
    $region27: #{transformer_encoder_layer.3} parent=1 // pred_check_branch
      %117 = sbr.rel (0) target = $region29
    $region28: #{transformer_encoder_layer.3} parent=1 // pred_region
      _
    $region29: #{transformer_encoder_layer.3} parent=1 // pred_fallthru
      _
    // Predicated region
    $region30: #{transformer_encoder_layer.3} parent=1 // pred_check
      _
    $region31: #{transformer_encoder_layer.3} parent=1 // pred_check_branch
      %119 = sbr.rel (0) target = $region33
    $region32: #{transformer_encoder_layer.3} parent=1 // pred_region
      _
    $region33: #{transformer_encoder_layer.3} parent=1 // pred_fallthru
      _
    // Predicated region
    $region34: #{transformer_encoder_layer.3} parent=1 // pred_check
      _
    $region35: #{transformer_encoder_layer.3} parent=1 // pred_check_branch
      %121 = sbr.rel (0) target = $region37
    $region36: #{transformer_encoder_layer.3} parent=1 // pred_region
      _
    $region37: #{transformer_encoder_layer.3} parent=1 // pred_fallthru
      _
    // Predicated region
    $region38: #{transformer_encoder_layer.3} parent=1 // pred_check
      _
    $region39: #{transformer_encoder_layer.3} parent=1 // pred_check_branch
      %123 = sbr.rel (0) target = $region41
    $region40: #{transformer_encoder_layer.3} parent=1 // pred_region
      _
    $region41: #{transformer_encoder_layer.3} parent=1 // pred_fallthru
      _
    // Predicated region
    $region42: #{transformer_encoder_layer.3} parent=1 // pred_check
      _
    $region43: #{transformer_encoder_layer.3} parent=1 // pred_check_branch
      %125 = sbr.rel (0) target = $region45
    $region44: #{transformer_encoder_layer.3} parent=1 // pred_region
      _
    $region45: #{transformer_encoder_layer.3} parent=1 // pred_fallthru
      _
    %126 = vsyncpa [#allocation3], 1
    %127 = vsyncpa [#allocation5], 1

// kernel: transformer_encoder_layer.4
$region0: #{transformer_encoder_layer.4}
  #allocation0 [shape = 'u32[]', space=smem, size = 0x4, offset = 0x4, fixed_abs, tag = 'smem constant byte address 0x4 - core index']
  #allocation1 [shape = 'u32[72,128]{1,0:T(1,128)}', space=vmem, size = 0x9000, scoped, tag = 'internal scratch']
  #allocation2 [shape = 'f32[8,1]{1,0:T(8,128)}', space=vmem, size = 0x1000, scoped, tag = 'scratch operand']
  #allocation3 [shape = 'f32[8,1]{1,0:T(8,128)}', space=vmem, size = 0x1000, scoped, tag = 'scratch operand']
  #allocation4 [shape = 'f32[8,8]{1,0:T(8,128)}', space=vmem, size = 0x1000, scoped, tag = 'scratch operand']
  %s0 = inlined_call_operand.vmem [shape: bf16[8,8,8], index: 0, kind: input, shape index: {}]
  %s1 = inlined_call_operand.vmem [shape: bf16[8,8,8], index: 1, kind: input, shape index: {}]
  %s2 = inlined_call_operand.vmem [shape: bf16[8,8,8], index: 2, kind: input, shape index: {}]
  %s3 = inlined_call_operand.vmem [shape: f32[8,8,8], index: 3, kind: output, shape index: {}]
  %s4 = sld [smem:[#allocation0]]
  $region53: #{transformer_encoder_layer.4} parent=0
    _
  %s6 = ssub.s32 1, %s4
  %s7 = scalar_select 0, %s6, %s4
  loop: start=0, step=1, limit=10
  $region2: #{transformer_encoder_layer.4} parent=0 // loop_pre_header
    _
  $region3: #{transformer_encoder_layer.4} parent=0 // loop_header
    %s9 = sphi 0, %s13
    %p10 = scmp.ge.s32.totalorder %s9, 10
    %s16 = sphi 0, %s35
    %s17 = sphi 0, %s31
    %s18 = sphi 0, %s27
    %s19 = sphi 0, %s16
    %s20 = sphi 0, %s17
    %s21 = sphi 0, %s18
    %s22 = sphi 0, %s19
    %s23 = sphi 0, %s20
    %s24 = sphi 0, %s21
    %s40 = sphi 0, %s42
    %s43 = sphi 0, %s40
    %s44 = sphi 0, %s43
    %s60 = sphi 0, %s44
    %s68 = sphi 0, %s70
    %s71 = sphi 0, %s68
    %s72 = sphi 0, %s71
    %s88 = sphi 0, %s72
    %s96 = sphi 0, %s98
    %s99 = sphi 0, %s96
    %s100 = sphi 0, %s99
    %s116 = sphi 0, %s100
    %s124 = sphi 0, %s126
    %s127 = sphi 0, %s124
    %s128 = sphi 0, %s127
    %s144 = sphi 0, %s128
  $region4: #{transformer_encoder_layer.4} parent=0 // loop_header_branch
    %12 = sbr.rel (%p10) target = $region8
  $region5: #{transformer_encoder_layer.4} parent=0 // loop_body
    %s14 = ssub.s32 %s9, 1
    %s15 = ssub.s32 %s9, 2
    %s25 = sadd.s32 1, %s18
    %p26 = scmp.ge.s32.totalorder %s25, 1
    %s27 = scalar_select %p26, 0, %s25
    %s28 = sadd.s32 1, %s17
    %s29 = scalar_select %p26, %s28, %s17
    %p30 = scmp.ge.s32.totalorder %s29, 1
    %s31 = scalar_select %p30, 0, %s29
    %s32 = sadd.s32 1, %s16
    %s33 = scalar_select %p30, %s32, %s16
    %p34 = scmp.ge.s32.totalorder %s33, 8
    %s35 = scalar_select %p34, 0, %s33
    %s36 = ssub.s32 %s16, %s35
    %s37 = ssub.s32 %s17, %s31
    %s38 = sor.u32 %s36, %s37
    %p39 = scmp.eq.s32.totalorder %s38, 0
    %s41 = sadd.s32 %s40, 1
    %s42 = scalar_select %p39, %s40, %s41
    %p45 = pneg %p39
    %p46 = scmp.eq.s32.totalorder %s9, 7
    %p47 = por %p45, %p46
    %p48 = scmp.ne.s32.totalorder %s40, %s43
    %p49 = scmp.eq.s32.totalorder %s9, 0
    %p50 = por %p48, %p49
    %p51 = scmp.ne.s32.totalorder %s40, %s43
    %p52 = scmp.eq.s32.totalorder %s14, 7
    %p53 = por %p51, %p52
    %p54 = scmp.ne.s32.totalorder %s43, %s44
    %p55 = scmp.eq.s32.totalorder %s14, 0
    %p56 = por %p54, %p55
    %p57 = scmp.ne.s32.totalorder %s43, %s44
    %p58 = scmp.eq.s32.totalorder %s15, 7
    %p59 = por %p57, %p58
    %p61 = scmp.ne.s32.totalorder %s44, %s60
    %p62 = scmp.eq.s32.totalorder %s15, 0
    %p63 = por %p61, %p62
    %s64 = ssub.s32 %s16, %s35
    %s65 = ssub.s32 %s18, %s27
    %s66 = sor.u32 %s64, %s65
    %p67 = scmp.eq.s32.totalorder %s66, 0
    %s69 = sadd.s32 %s68, 1
    %s70 = scalar_select %p67, %s68, %s69
    %p73 = pneg %p67
    %p74 = scmp.eq.s32.totalorder %s9, 7
    %p75 = por %p73, %p74
    %p76 = scmp.ne.s32.totalorder %s68, %s71
    %p77 = scmp.eq.s32.totalorder %s9, 0
    %p78 = por %p76, %p77
    %p79 = scmp.ne.s32.totalorder %s68, %s71
    %p80 = scmp.eq.s32.totalorder %s14, 7
    %p81 = por %p79, %p80
    %p82 = scmp.ne.s32.totalorder %s71, %s72
    %p83 = scmp.eq.s32.totalorder %s14, 0
    %p84 = por %p82, %p83
    %p85 = scmp.ne.s32.totalorder %s71, %s72
    %p86 = scmp.eq.s32.totalorder %s15, 7
    %p87 = por %p85, %p86
    %p89 = scmp.ne.s32.totalorder %s72, %s88
    %p90 = scmp.eq.s32.totalorder %s15, 0
    %p91 = por %p89, %p90
    %s92 = ssub.s32 %s16, %s35
    %s93 = ssub.s32 %s18, %s27
    %s94 = sor.u32 %s92, %s93
    %p95 = scmp.eq.s32.totalorder %s94, 0
    %s97 = sadd.s32 %s96, 1
    %s98 = scalar_select %p95, %s96, %s97
    %p101 = pneg %p95
    %p102 = scmp.eq.s32.totalorder %s9, 7
    %p103 = por %p101, %p102
    %p104 = scmp.ne.s32.totalorder %s96, %s99
    %p105 = scmp.eq.s32.totalorder %s9, 0
    %p106 = por %p104, %p105
    %p107 = scmp.ne.s32.totalorder %s96, %s99
    %p108 = scmp.eq.s32.totalorder %s14, 7
    %p109 = por %p107, %p108
    %p110 = scmp.ne.s32.totalorder %s99, %s100
    %p111 = scmp.eq.s32.totalorder %s14, 0
    %p112 = por %p110, %p111
    %p113 = scmp.ne.s32.totalorder %s99, %s100
    %p114 = scmp.eq.s32.totalorder %s15, 7
    %p115 = por %p113, %p114
    %p117 = scmp.ne.s32.totalorder %s100, %s116
    %p118 = scmp.eq.s32.totalorder %s15, 0
    %p119 = por %p117, %p118
    %s120 = ssub.s32 %s16, %s35
    %s121 = ssub.s32 %s17, %s31
    %s122 = sor.u32 %s120, %s121
    %p123 = scmp.eq.s32.totalorder %s122, 0
    %s125 = sadd.s32 %s124, 1
    %s126 = scalar_select %p123, %s124, %s125
    %p129 = pneg %p123
    %p130 = scmp.eq.s32.totalorder %s9, 7
    %p131 = por %p129, %p130
    %p132 = scmp.ne.s32.totalorder %s124, %s127
    %p133 = scmp.eq.s32.totalorder %s9, 0
    %p134 = por %p132, %p133
    %p135 = scmp.ne.s32.totalorder %s124, %s127
    %p136 = scmp.eq.s32.totalorder %s14, 7
    %p137 = por %p135, %p136
    %p138 = scmp.ne.s32.totalorder %s127, %s128
    %p139 = scmp.eq.s32.totalorder %s14, 0
    %p140 = por %p138, %p139
    %p141 = scmp.ne.s32.totalorder %s127, %s128
    %p142 = scmp.eq.s32.totalorder %s15, 7
    %p143 = por %p141, %p142
    %p145 = scmp.ne.s32.totalorder %s128, %s144
    %p146 = scmp.eq.s32.totalorder %s15, 0
    %p147 = por %p145, %p146
    %p148 = scmp.le.s32.totalorder 1, %s9
    %p149 = scmp.lt.s32.totalorder %s9, 9
    %p150 = pnand %p148, %p149
    %p151 = pneg %p150
    // Predicated region
    $region9: #{transformer_encoder_layer.4} parent=5 // pred_check
      _
    $region10: #{transformer_encoder_layer.4} parent=5 // pred_check_branch
      %153 = sbr.rel (%p150) target = $region12
    $region11: #{transformer_encoder_layer.4} parent=5 // pred_region
      %s154 = ssub.s32 %s9, 1
    $region12: #{transformer_encoder_layer.4} parent=5 // pred_fallthru
      _
    %p155 = scmp.lt.s32.totalorder %s9, 8
    // Predicated region
    $region13: #{transformer_encoder_layer.4} parent=5 // pred_check
      %p156 = pneg %p155
    $region14: #{transformer_encoder_layer.4} parent=5 // pred_check_branch
      %158 = sbr.rel (%p156) target = $region16
    $region15: #{transformer_encoder_layer.4} parent=5 // pred_region
      // Predicated region
      $region17: #{transformer_encoder_layer.4} parent=15 // pred_check
        %p159 = pneg %p50
      $region18: #{transformer_encoder_layer.4} parent=15 // pred_check_branch
        %161 = sbr.rel (%p159) target = $region20
      $region19: #{transformer_encoder_layer.4} parent=15 // pred_region
        %p162 = scmp.lt.s32.totalorder %s16, 7
        %s163 = scalar_select %p162, %s16, 7
        %p164 = scmp.lt.s32.totalorder %s17, 0
        %s165 = scalar_select %p164, %s17, 0
        %s166 = sadd.s32 %s165, %s163
        %s167 = smul.addr %s166, 4
        %s168 = scalar_lea.vmem %s0, %s167
      $region20: #{transformer_encoder_layer.4} parent=15 // pred_fallthru
        _
      // Predicated region
      $region21: #{transformer_encoder_layer.4} parent=15 // pred_check
        %p169 = pneg %p78
      $region22: #{transformer_encoder_layer.4} parent=15 // pred_check_branch
        %171 = sbr.rel (%p169) target = $region24
      $region23: #{transformer_encoder_layer.4} parent=15 // pred_region
        %p172 = scmp.lt.s32.totalorder %s16, 7
        %s173 = scalar_select %p172, %s16, 7
        %p174 = scmp.lt.s32.totalorder %s18, 0
        %s175 = scalar_select %p174, %s18, 0
        %s176 = sadd.s32 %s175, %s173
        %s177 = smul.addr %s176, 4
        %s178 = scalar_lea.vmem %s1, %s177
      $region24: #{transformer_encoder_layer.4} parent=15 // pred_fallthru
        _
      // Predicated region
      $region25: #{transformer_encoder_layer.4} parent=15 // pred_check
        %p179 = pneg %p106
      $region26: #{transformer_encoder_layer.4} parent=15 // pred_check_branch
        %181 = sbr.rel (%p179) target = $region28
      $region27: #{transformer_encoder_layer.4} parent=15 // pred_region
        %p182 = scmp.lt.s32.totalorder %s16, 7
        %s183 = scalar_select %p182, %s16, 7
        %p184 = scmp.lt.s32.totalorder %s18, 0
        %s185 = scalar_select %p184, %s18, 0
        %s186 = sadd.s32 %s185, %s183
        %s187 = smul.addr %s186, 4
        %s188 = scalar_lea.vmem %s2, %s187
      $region28: #{transformer_encoder_layer.4} parent=15 // pred_fallthru
        _
    $region16: #{transformer_encoder_layer.4} parent=5 // pred_fallthru
      _
    %p189 = scmp.le.s32.totalorder 1, %s9
    %p190 = scmp.lt.s32.totalorder %s9, 9
    %p191 = pnand %p189, %p190
    %p192 = pneg %p191
    // Predicated region
    $region29: #{transformer_encoder_layer.4} parent=5 // pred_check
      _
    $region30: #{transformer_encoder_layer.4} parent=5 // pred_check_branch
      %194 = sbr.rel (%p191) target = $region32
    $region31: #{transformer_encoder_layer.4} parent=5 // pred_region
      %s195 = ssub.s32 %s9, 1
      %p196 = scmp.lt.s32.totalorder %s19, 7
      %s197 = scalar_select %p196, %s19, 7
      %p198 = scmp.lt.s32.totalorder %s20, 0
      %s199 = scalar_select %p198, %s20, 0
      %s200 = sadd.s32 %s199, %s197
      %s201 = smul.addr %s200, 4
      %s202 = scalar_lea.vmem %s0, %s201
      %p203 = pneg %p56
      %p204 = pneg %p53
      %p205 = scmp.lt.s32.totalorder %s19, 7
      %s206 = scalar_select %p205, %s19, 7
      %p207 = scmp.lt.s32.totalorder %s21, 0
      %s208 = scalar_select %p207, %s21, 0
      %s209 = sadd.s32 %s208, %s206
      %s210 = smul.addr %s209, 4
      %s211 = scalar_lea.vmem %s1, %s210
      %p212 = pneg %p84
      %p213 = pneg %p81
      %p214 = scmp.lt.s32.totalorder %s19, 7
      %s215 = scalar_select %p214, %s19, 7
      %p216 = scmp.lt.s32.totalorder %s21, 0
      %s217 = scalar_select %p216, %s21, 0
      %s218 = sadd.s32 %s217, %s215
      %s219 = smul.addr %s218, 4
      %s220 = scalar_lea.vmem %s2, %s219
      %p221 = pneg %p112
      %p222 = pneg %p109
      %p223 = pneg %p140
      %p224 = pneg %p137
      %p225 = scmp.lt.s32.totalorder %s19, 7
      %s226 = scalar_select %p225, %s19, 7
      %p227 = scmp.lt.s32.totalorder %s20, 0
      %s228 = scalar_select %p227, %s20, 0
      %s229 = sadd.s32 %s228, %s226
      %s230 = smul.addr %s229, 8
      %s231 = scalar_lea.vmem %s3, %s230
      %p232 = scmp.lt.s32.totalorder %s19, 7
      %s233 = scalar_select %p232, %s19, 7
      %p234 = scmp.lt.s32.totalorder %s20, 0
      %s235 = scalar_select %p234, %s20, 0
      %s236 = sadd.s32 %s235, %s233
      %s237 = smul.addr %s236, 4
      %s238 = scalar_lea.vmem %s0, %s237
      %p239 = scmp.lt.s32.totalorder %s19, 7
      %s240 = scalar_select %p239, %s19, 7
      %p241 = scmp.lt.s32.totalorder %s21, 0
      %s242 = scalar_select %p241, %s21, 0
      %s243 = sadd.s32 %s242, %s240
      %s244 = smul.addr %s243, 4
      %s245 = scalar_lea.vmem %s1, %s244
      %p246 = scmp.lt.s32.totalorder %s19, 7
      %s247 = scalar_select %p246, %s19, 7
      %p248 = scmp.lt.s32.totalorder %s21, 0
      %s249 = scalar_select %p248, %s21, 0
      %s250 = sadd.s32 %s249, %s247
      %s251 = smul.addr %s250, 4
      %s252 = scalar_lea.vmem %s2, %s251
      %p253 = scmp.lt.s32.totalorder %s19, 7
      %s254 = scalar_select %p253, %s19, 7
      %p255 = scmp.lt.s32.totalorder %s20, 0
      %s256 = scalar_select %p255, %s20, 0
      %s257 = sadd.s32 %s256, %s254
      %s258 = smul.addr %s257, 8
      %s259 = scalar_lea.vmem %s3, %s258
      %p261 = scmp.eq.s32.totalorder %s21, 0
      // Predicated region
      $region33: #{transformer_encoder_layer.4} parent=31 // pred_check
        %p262 = pneg %p261
      $region34: #{transformer_encoder_layer.4} parent=31 // pred_check_branch
        %264 = sbr.rel (%p262) target = $region36
      $region35: #{transformer_encoder_layer.4} parent=31 // pred_region
        %vm265 = vcmask 7168
        %266 = vst.msk [vmem:[#allocation2] sm:$0xff] %vm265, -inf
        %267 = vst.msk [vmem:[#allocation3] sm:$0xff] %vm265, 0.0
        %vm268 = vcmask 64512
        %269 = vst.msk [vmem:[#allocation4] sm:$0xff] %vm268, 0.0
      $region36: #{transformer_encoder_layer.4} parent=31 // pred_fallthru
        _
      %v270 = vld [vmem:[%s238] sm:$0xf]
      %v271 = vld [vmem:[%s245] sm:$0xf]
      %v272 = vld [vmem:[%s252] sm:$0xf]
      %vm273 = vcmask 64512
      %v275 = vsel %vm273, %v270, 0
      %v278 = vsel %vm273, %v271, 0
      %280 = vmatpush.bf16.xpose.msra.mxu0 0
      %281 = vmatpush.bf16.xpose.msra.mxu0 0
      %282 = vmatpush.bf16.xpose.msra.mxu0 0
      %283 = vmatpush.bf16.xpose.msra.mxu0 0
      %284 = vmatpush.bf16.xpose.msra.mxu0 0
      %285 = vmatpush.bf16.xpose.msra.mxu0 0
      %286 = vmatpush.bf16.xpose.msra.mxu0 0
      %287 = vmatpush.bf16.xpose.msra.mxu0 %v278
      %288 = vmatmul.bf16.gmra.mxu0 %v275
      %v289 = vpop.f32.mrf.mxu0
      %v290 = vadd.f32 0.0, %v289
      %v291 = vpop.f32.mrf.mxu0
      %292 = vdwg.mxu0
      %v293 = vmul.f32 %v290, 0.35355338
      %v294 = vld [vmem:[#allocation2] sm:$0xff]
      %v295 = vsel %vm273, %v293, -inf
      %296 = vmax.xlane.f32.xlu0 %v295
      %v297 = vpop.xlane.xlu0 %296
      %v298 = vmax.f32 %v294, %v297
      %v299 = vsub.f32 %v294, %v298
      %v300 = vmul.f32 %v299, 1.442695
      %v301 = vpow.pop %v300
      %303 = vset.pattern.permute.xlu0 0
      %304 = vperm.xlu0 %303, %v298
      %v305 = vpop.permute.xlu0 %304
      %v307 = vsub.f32 %v293, %v305
      %v308 = vmul.f32 %v307, 1.442695
      %v309 = vpow.pop %v308
      %v310 = vld [vmem:[#allocation3] sm:$0xff]
      %v311 = vmul.f32 %v301, %v310
      %v312 = vsel %vm273, %v309, 0.0
      %313 = vadd.xlane.f32.xlu0 %v312
      %v314 = vpop.xlane.xlu0 %313
      %v315 = vadd.f32 %v311, %v314
      %vm316 = vcmask 7168
      %317 = vst.msk [vmem:[#allocation3] sm:$0xff] %vm316, %v315
      %v318 = vld [vmem:[#allocation4] sm:$0xff]
      %320 = vset.pattern.permute.xlu0 0
      %321 = vperm.xlu0 %320, %v301
      %v322 = vpop.permute.xlu0 %321
      %v324 = vmul.f32 %v322, %v318
      %v325 = vpack.c.bf16 %v309, %v309
      %v327 = vsel %vm273, %v325, 0
      %vm329 = vcmask 1043456
      %v331 = vsel %vm329, %v272, 0
      %333 = vmatpush.bf16.msra.mxu0 0
      %334 = vmatpush.bf16.msra.mxu0 0
      %335 = vmatpush.bf16.msra.mxu0 0
      %336 = vmatpush.bf16.msra.mxu0 0
      %337 = vmatpush.bf16.msra.mxu0 0
      %338 = vmatpush.bf16.msra.mxu0 0
      %339 = vmatpush.bf16.msra.mxu0 0
      %340 = vmatpush.bf16.msra.mxu0 %v331
      %341 = vmatmul.bf16.gmra.mxu0 %v327
      %v342 = vpop.f32.mrf.mxu0
      %v343 = vadd.f32 0.0, %v342
      %v344 = vpop.f32.mrf.mxu0
      %345 = vdwg.mxu0
      %v346 = vadd.f32 %v324, %v343
      %347 = vst.msk [vmem:[#allocation4] sm:$0xff] %vm273, %v346
      %348 = vst.msk [vmem:[#allocation2] sm:$0xff] %vm316, %v298
      // Predicated region
      $region37: #{transformer_encoder_layer.4} parent=31 // pred_check
        %p349 = pneg %p261
      $region38: #{transformer_encoder_layer.4} parent=31 // pred_check_branch
        %351 = sbr.rel (%p349) target = $region40
      $region39: #{transformer_encoder_layer.4} parent=31 // pred_region
        %v352 = vld [vmem:[#allocation3] sm:$0xff]
        %v353 = vrcp.pop %v352
        %v354 = vld [vmem:[#allocation4] sm:$0xff]
        %356 = vset.pattern.permute.xlu0 0
        %357 = vperm.xlu0 %356, %v353
        %v358 = vpop.permute.xlu0 %357
        %v360 = vmul.f32 %v354, %v358
        %361 = vst.msk [vmem:[%s259] sm:$0xff] %vm273, %v360
      $region40: #{transformer_encoder_layer.4} parent=31 // pred_fallthru
        _
      %p362 = scmp.lt.s32.totalorder %s19, 7
      %s363 = scalar_select %p362, %s19, 7
      %p364 = scmp.lt.s32.totalorder %s20, 0
      %s365 = scalar_select %p364, %s20, 0
      %s366 = sadd.s32 %s365, %s363
      %s367 = smul.addr %s366, 8
      %s368 = scalar_lea.vmem %s3, %s367
      // Predicated region
      $region41: #{transformer_encoder_layer.4} parent=31 // pred_check
        %p369 = pneg %p137
      $region42: #{transformer_encoder_layer.4} parent=31 // pred_check_branch
        %371 = sbr.rel (%p369) target = $region44
      $region43: #{transformer_encoder_layer.4} parent=31 // pred_region
        _
      $region44: #{transformer_encoder_layer.4} parent=31 // pred_fallthru
        _
    $region32: #{transformer_encoder_layer.4} parent=5 // pred_fallthru
      _
    %p372 = scmp.le.s32.totalorder 2, %s9
    // Predicated region
    $region45: #{transformer_encoder_layer.4} parent=5 // pred_check
      %p373 = pneg %p372
    $region46: #{transformer_encoder_layer.4} parent=5 // pred_check_branch
      %375 = sbr.rel (%p373) target = $region48
    $region47: #{transformer_encoder_layer.4} parent=5 // pred_region
      %s376 = ssub.s32 %s9, 2
      // Predicated region
      $region49: #{transformer_encoder_layer.4} parent=47 // pred_check
        %p377 = pneg %p143
      $region50: #{transformer_encoder_layer.4} parent=47 // pred_check_branch
        %379 = sbr.rel (%p377) target = $region52
      $region51: #{transformer_encoder_layer.4} parent=47 // pred_region
        %p380 = scmp.lt.s32.totalorder %s22, 7
        %s381 = scalar_select %p380, %s22, 7
        %p382 = scmp.lt.s32.totalorder %s23, 0
        %s383 = scalar_select %p382, %s23, 0
        %s384 = sadd.s32 %s383, %s381
        %s385 = smul.addr %s384, 8
        %s386 = scalar_lea.vmem %s3, %s385
      $region52: #{transformer_encoder_layer.4} parent=47 // pred_fallthru
        _
    $region48: #{transformer_encoder_layer.4} parent=5 // pred_fallthru
      _
  $region6: #{transformer_encoder_layer.4} parent=0 // loop_footer
    %s13 = sadd.s32 1, %s9
  $region7: #{transformer_encoder_layer.4} parent=0 // loop_footer_branch
    %8 = sbr.rel target = $region3
  $region8: #{transformer_encoder_layer.4} parent=0 // loop_exit
    _

// kernel: transformer_encoder_layer.5
$region0: #{transformer_encoder_layer.5}
  #allocation0 [shape = 'u32[]', space=smem, size = 0x4, offset = 0x4, fixed_abs, tag = 'smem constant byte address 0x4 - core index']
  #allocation1 [shape = 'u32[72,128]{1,0:T(1,128)}', space=vmem, size = 0x9000, scoped, tag = 'internal scratch']
  %s0 = inlined_call_operand.vmem [shape: f32[16,32], index: 0, kind: input, shape index: {}]
  %s1 = inlined_call_operand.vmem [shape: f32[16,32], index: 1, kind: input, shape index: {}]
  %s2 = inlined_call_operand.vmem [shape: bf16[32,32], index: 2, kind: input, shape index: {}]
  %s3 = inlined_call_operand.vmem [shape: f32[1,32], index: 3, kind: input, shape index: {}]
  %s4 = inlined_call_operand.vmem [shape: bf16[32,64], index: 4, kind: input, shape index: {}]
  %s5 = inlined_call_operand.vmem [shape: f32[1,64], index: 5, kind: input, shape index: {}]
  %s6 = inlined_call_operand.vmem [shape: bf16[64,32], index: 6, kind: input, shape index: {}]
  %s7 = inlined_call_operand.vmem [shape: f32[1,32], index: 7, kind: input, shape index: {}]
  %s8 = inlined_call_operand.vmem [shape: f32[1,32], index: 8, kind: input, shape index: {}]
  %s9 = inlined_call_operand.vmem [shape: f32[1,32], index: 9, kind: input, shape index: {}]
  %s10 = inlined_call_operand.vmem [shape: f32[1,32], index: 10, kind: input, shape index: {}]
  %s11 = inlined_call_operand.vmem [shape: f32[1,32], index: 11, kind: input, shape index: {}]
  %s12 = inlined_call_operand.hbm [shape: f32[16,32], index: 12, kind: output, shape index: {}]
  %s13 = sld [smem:[#allocation0]]
  $region58: #{transformer_encoder_layer.5} parent=0
    _
  %s15 = ssub.s32 1, %s13
  %s16 = scalar_select 0, %s15, %s13
  $region1: #{transformer_encoder_layer.5} parent=0
    #allocation2 [shape = 'u8[8192]{0}', space=vmem, size = 0x2000, scoped, tag = 'output window, operand 0, single buffered']
    #allocation3 [shape = 's32[1]{0}', space=sflag, size = 0x4, scoped, tag = 'scoped memory for transformer_encoder_layer.5']
    %17 = vsyncpa [#allocation3], 0
    // Predicated region
    $region2: #{transformer_encoder_layer.5} parent=1 // pred_check
      _
    $region3: #{transformer_encoder_layer.5} parent=1 // pred_check_branch
      %19 = sbr.rel (0) target = $region5
    $region4: #{transformer_encoder_layer.5} parent=1 // pred_region
      _
    $region5: #{transformer_encoder_layer.5} parent=1 // pred_fallthru
      _
    // Predicated region
    $region6: #{transformer_encoder_layer.5} parent=1 // pred_check
      _
    $region7: #{transformer_encoder_layer.5} parent=1 // pred_check_branch
      %21 = sbr.rel (0) target = $region9
    $region8: #{transformer_encoder_layer.5} parent=1 // pred_region
      _
    $region9: #{transformer_encoder_layer.5} parent=1 // pred_fallthru
      _
    // Predicated region
    $region10: #{transformer_encoder_layer.5} parent=1 // pred_check
      _
    $region11: #{transformer_encoder_layer.5} parent=1 // pred_check_branch
      %23 = sbr.rel (0) target = $region13
    $region12: #{transformer_encoder_layer.5} parent=1 // pred_region
      _
    $region13: #{transformer_encoder_layer.5} parent=1 // pred_fallthru
      _
    // Predicated region
    $region14: #{transformer_encoder_layer.5} parent=1 // pred_check
      _
    $region15: #{transformer_encoder_layer.5} parent=1 // pred_check_branch
      %25 = sbr.rel (0) target = $region17
    $region16: #{transformer_encoder_layer.5} parent=1 // pred_region
      _
    $region17: #{transformer_encoder_layer.5} parent=1 // pred_fallthru
      _
    // Predicated region
    $region18: #{transformer_encoder_layer.5} parent=1 // pred_check
      _
    $region19: #{transformer_encoder_layer.5} parent=1 // pred_check_branch
      %27 = sbr.rel (0) target = $region21
    $region20: #{transformer_encoder_layer.5} parent=1 // pred_region
      _
    $region21: #{transformer_encoder_layer.5} parent=1 // pred_fallthru
      _
    // Predicated region
    $region22: #{transformer_encoder_layer.5} parent=1 // pred_check
      _
    $region23: #{transformer_encoder_layer.5} parent=1 // pred_check_branch
      %29 = sbr.rel (0) target = $region25
    $region24: #{transformer_encoder_layer.5} parent=1 // pred_region
      _
    $region25: #{transformer_encoder_layer.5} parent=1 // pred_fallthru
      _
    // Predicated region
    $region26: #{transformer_encoder_layer.5} parent=1 // pred_check
      _
    $region27: #{transformer_encoder_layer.5} parent=1 // pred_check_branch
      %31 = sbr.rel (0) target = $region29
    $region28: #{transformer_encoder_layer.5} parent=1 // pred_region
      _
    $region29: #{transformer_encoder_layer.5} parent=1 // pred_fallthru
      _
    // Predicated region
    $region30: #{transformer_encoder_layer.5} parent=1 // pred_check
      _
    $region31: #{transformer_encoder_layer.5} parent=1 // pred_check_branch
      %33 = sbr.rel (0) target = $region33
    $region32: #{transformer_encoder_layer.5} parent=1 // pred_region
      _
    $region33: #{transformer_encoder_layer.5} parent=1 // pred_fallthru
      _
    // Predicated region
    $region34: #{transformer_encoder_layer.5} parent=1 // pred_check
      _
    $region35: #{transformer_encoder_layer.5} parent=1 // pred_check_branch
      %35 = sbr.rel (0) target = $region37
    $region36: #{transformer_encoder_layer.5} parent=1 // pred_region
      _
    $region37: #{transformer_encoder_layer.5} parent=1 // pred_fallthru
      _
    // Predicated region
    $region38: #{transformer_encoder_layer.5} parent=1 // pred_check
      _
    $region39: #{transformer_encoder_layer.5} parent=1 // pred_check_branch
      %37 = sbr.rel (0) target = $region41
    $region40: #{transformer_encoder_layer.5} parent=1 // pred_region
      _
    $region41: #{transformer_encoder_layer.5} parent=1 // pred_fallthru
      _
    // Predicated region
    $region42: #{transformer_encoder_layer.5} parent=1 // pred_check
      _
    $region43: #{transformer_encoder_layer.5} parent=1 // pred_check_branch
      %39 = sbr.rel (0) target = $region45
    $region44: #{transformer_encoder_layer.5} parent=1 // pred_region
      _
    $region45: #{transformer_encoder_layer.5} parent=1 // pred_fallthru
      _
    // Predicated region
    $region46: #{transformer_encoder_layer.5} parent=1 // pred_check
      _
    $region47: #{transformer_encoder_layer.5} parent=1 // pred_check_branch
      %41 = sbr.rel (0) target = $region49
    $region48: #{transformer_encoder_layer.5} parent=1 // pred_region
      _
    $region49: #{transformer_encoder_layer.5} parent=1 // pred_fallthru
      _
    %v43 = vld [vmem:[%s0] sm:$0xff]
    %v44 = vld [vmem:[%s0 + $0x8] sm:$0xff]
    %v45 = vld [vmem:[%s1] sm:$0xff]
    %v46 = vld [vmem:[%s1 + $0x8] sm:$0xff]
    %v47 = vpack.c.bf16 %v44, %v43
    %v48 = vld [vmem:[%s2] sm:$0xf]
    %v49 = vld [vmem:[%s2 + $0x4] sm:$0xf]
    %v50 = vld [vmem:[%s2 + $0x8] sm:$0xf]
    %v51 = vld [vmem:[%s2 + $0xc] sm:$0xf]
    %v52 = vld [vmem:[%s3] sm:$0x1]
    %v54 = vperm.slane %v52, 0
    %v60 = vunpack.c.l.b16 %v48
    %v61 = vunpack.c.l.b16 %v49
    %v62 = vunpack.c.l.b16 %v50
    %v63 = vunpack.c.l.b16 %v51
    %v64 = vpack.c.b16 %v61, %v60
    %v65 = vpack.c.b16 %v63, %v62
    %vm68 = vcmask 261120
    %v70 = vsel %vm68, %v47, 0
    %72 = vmatpush.bf16.msra.mxu0 0
    %73 = vmatpush.bf16.msra.mxu0 0
    %74 = vmatpush.bf16.msra.mxu0 0
    %75 = vmatpush.bf16.msra.mxu0 0
    %76 = vmatpush.bf16.msra.mxu0 0
    %77 = vmatpush.bf16.msra.mxu0 0
    %78 = vmatpush.bf16.msra.mxu0 %v65
    %79 = vmatpush.bf16.msra.mxu0 %v64
    %80 = vmatmul.bf16.gmra.mxu0 %v70
    %v81 = vpop.f32.mrf.mxu0
    %v82 = vadd.f32 %v54, %v81
    %v83 = vpop.f32.mrf.mxu0
    %v84 = vadd.f32 %v54, %v83
    %85 = vdwg.mxu0
    %v86 = vadd.f32 %v45, %v82
    %v87 = vadd.f32 %v46, %v84
    %v88 = vsel %vm68, %v86, 0.0
    %89 = vadd.xlane.f32.xlu0 %v88
    %v90 = vpop.xlane.xlu0 %89
    %v91 = vsel %vm68, %v87, 0.0
    %92 = vadd.xlane.f32.xlu0 %v91
    %v93 = vpop.xlane.xlu0 %92
    %v94 = vrcp.pop 32.0
    %v95 = vmul.f32 32.0, %v94
    %v96 = vsub.f32 1.0, %v95
    %v97 = vmul.f32 %v94, %v96
    %v98 = vadd.f32 %v94, %v97
    %vm99 = vweird.f32 %v94
    %v100 = vsel %vm99, %v94, %v98
    %v101 = vmul.f32 %v90, %v100
    %v102 = vmul.f32 %v93, %v100
    %v103 = vsub.f32 %v86, %v101
    %v104 = vsub.f32 %v87, %v102
    %v105 = vmul.f32 %v103, %v103
    %v106 = vmul.f32 %v104, %v104
    %v107 = vsel %vm68, %v105, 0.0
    %108 = vadd.xlane.f32.xlu0 %v107
    %v109 = vpop.xlane.xlu0 %108
    %v110 = vsel %vm68, %v106, 0.0
    %111 = vadd.xlane.f32.xlu0 %v110
    %v112 = vpop.xlane.xlu0 %111
    %v113 = vmul.f32 %v109, %v100
    %v114 = vmul.f32 %v112, %v100
    %v115 = vadd.f32 %v113, 1e-05
    %v116 = vadd.f32 %v114, 1e-05
    %v117 = vrsqrt.pop %v115
    %v118 = vmul.f32 %v117, %v115
    %v119 = vmul.f32 %v118, %v117
    %v120 = vmul.f32 0.5, %v119
    %v121 = vsub.f32 1.5, %v120
    %v122 = vmul.f32 %v117, %v121
    %vm123 = vweird.f32 %v115
    %vm124 = vweird.f32 %v117
    %vm125 = vmor %vm123, %vm124
    %v126 = vsel %vm125, %v117, %v122
    %v127 = vrsqrt.pop %v116
    %v128 = vmul.f32 %v127, %v116
    %v129 = vmul.f32 %v128, %v127
    %v130 = vmul.f32 0.5, %v129
    %v131 = vsub.f32 1.5, %v130
    %v132 = vmul.f32 %v127, %v131
    %vm133 = vweird.f32 %v116
    %vm134 = vweird.f32 %v127
    %vm135 = vmor %vm133, %vm134
    %v136 = vsel %vm135, %v127, %v132
    %v137 = vmul.f32 %v103, %v126
    %v138 = vmul.f32 %v104, %v136
    %v139 = vld [vmem:[%s8] sm:$0x1]
    %v141 = vperm.slane %v139, 0
    %v143 = vmul.f32 %v137, %v141
    %v144 = vmul.f32 %v138, %v141
    %v145 = vld [vmem:[%s9] sm:$0x1]
    %v147 = vperm.slane %v145, 0
    %v149 = vadd.f32 %v143, %v147
    %v150 = vadd.f32 %v144, %v147
    %v151 = vpack.c.bf16 %v150, %v149
    %v152 = vld [vmem:[%s4] sm:$0xf]
    %v153 = vld [vmem:[%s4 + $0x4] sm:$0xf]
    %v154 = vld [vmem:[%s4 + $0x8] sm:$0xf]
    %v155 = vld [vmem:[%s4 + $0xc] sm:$0xf]
    %v156 = vld [vmem:[%s5] sm:$0x1]
    %v158 = vperm.slane %v156, 0
    %v164 = vunpack.c.l.b16 %v152
    %v165 = vunpack.c.l.b16 %v153
    %v166 = vunpack.c.l.b16 %v154
    %v167 = vunpack.c.l.b16 %v155
    %v168 = vpack.c.b16 %v165, %v164
    %v169 = vpack.c.b16 %v167, %v166
    %v173 = vsel %vm68, %v151, 0
    %175 = vmatpush.bf16.msra.mxu0 0
    %176 = vmatpush.bf16.msra.mxu0 0
    %177 = vmatpush.bf16.msra.mxu0 0
    %178 = vmatpush.bf16.msra.mxu0 0
    %179 = vmatpush.bf16.msra.mxu0 0
    %180 = vmatpush.bf16.msra.mxu0 0
    %181 = vmatpush.bf16.msra.mxu0 %v169
    %182 = vmatpush.bf16.msra.mxu0 %v168
    %183 = vmatmul.bf16.gmra.mxu0 %v173
    %v184 = vpop.f32.mrf.mxu0
    %v185 = vadd.f32 %v158, %v184
    %v186 = vpop.f32.mrf.mxu0
    %v187 = vadd.f32 %v158, %v186
    %188 = vdwg.mxu0
    %v189 = vmax.f32 %v185, 0.0
    %v190 = vmax.f32 %v187, 0.0
    %v191 = vpack.c.bf16 %v190, %v189
    %v192 = vld [vmem:[%s6] sm:$0xf]
    %v193 = vld [vmem:[%s6 + $0x4] sm:$0xf]
    %v194 = vld [vmem:[%s6 + $0x8] sm:$0xf]
    %v195 = vld [vmem:[%s6 + $0xc] sm:$0xf]
    %v196 = vld [vmem:[%s6 + $0x10] sm:$0xf]
    %v197 = vld [vmem:[%s6 + $0x14] sm:$0xf]
    %v198 = vld [vmem:[%s6 + $0x18] sm:$0xf]
    %v199 = vld [vmem:[%s6 + $0x1c] sm:$0xf]
    %v200 = vld [vmem:[%s7] sm:$0x1]
    %v202 = vperm.slane %v200, 0
    %v212 = vunpack.c.l.b16 %v192
    %v213 = vunpack.c.l.b16 %v193
    %v214 = vunpack.c.l.b16 %v194
    %v215 = vunpack.c.l.b16 %v195
    %v216 = vunpack.c.l.b16 %v196
    %v217 = vunpack.c.l.b16 %v197
    %v218 = vunpack.c.l.b16 %v198
    %v219 = vunpack.c.l.b16 %v199
    %v220 = vpack.c.b16 %v213, %v212
    %v221 = vpack.c.b16 %v215, %v214
    %v222 = vpack.c.b16 %v217, %v216
    %v223 = vpack.c.b16 %v219, %v218
    %vm228 = vcmask 523264
    %v230 = vsel %vm228, %v191, 0
    %232 = vmatpush.bf16.msra.mxu0 0
    %233 = vmatpush.bf16.msra.mxu0 0
    %234 = vmatpush.bf16.msra.mxu0 0
    %235 = vmatpush.bf16.msra.mxu0 0
    %236 = vmatpush.bf16.msra.mxu0 %v223
    %237 = vmatpush.bf16.msra.mxu0 %v222
    %238 = vmatpush.bf16.msra.mxu0 %v221
    %239 = vmatpush.bf16.msra.mxu0 %v220
    %240 = vmatmul.bf16.gmra.mxu0 %v230
    %v241 = vpop.f32.mrf.mxu0
    %v242 = vadd.f32 %v202, %v241
    %v243 = vpop.f32.mrf.mxu0
    %v244 = vadd.f32 %v202, %v243
    %245 = vdwg.mxu0
    %v246 = vadd.f32 %v149, %v242
    %v247 = vadd.f32 %v150, %v244
    %v248 = vsel %vm68, %v246, 0.0
    %249 = vadd.xlane.f32.xlu0 %v248
    %v250 = vpop.xlane.xlu0 %249
    %v251 = vsel %vm68, %v247, 0.0
    %252 = vadd.xlane.f32.xlu0 %v251
    %v253 = vpop.xlane.xlu0 %252
    %v254 = vmul.f32 %v250, %v100
    %v255 = vmul.f32 %v253, %v100
    %v256 = vsub.f32 %v246, %v254
    %v257 = vsub.f32 %v247, %v255
    %v258 = vmul.f32 %v256, %v256
    %v259 = vmul.f32 %v257, %v257
    %v260 = vsel %vm68, %v258, 0.0
    %261 = vadd.xlane.f32.xlu0 %v260
    %v262 = vpop.xlane.xlu0 %261
    %v263 = vsel %vm68, %v259, 0.0
    %264 = vadd.xlane.f32.xlu0 %v263
    %v265 = vpop.xlane.xlu0 %264
    %v266 = vmul.f32 %v262, %v100
    %v267 = vmul.f32 %v265, %v100
    %v268 = vadd.f32 %v266, 1e-05
    %v269 = vadd.f32 %v267, 1e-05
    %v270 = vrsqrt.pop %v268
    %v271 = vmul.f32 %v270, %v268
    %v272 = vmul.f32 %v271, %v270
    %v273 = vmul.f32 0.5, %v272
    %v274 = vsub.f32 1.5, %v273
    %v275 = vmul.f32 %v270, %v274
    %vm276 = vweird.f32 %v268
    %vm277 = vweird.f32 %v270
    %vm278 = vmor %vm276, %vm277
    %v279 = vsel %vm278, %v270, %v275
    %v280 = vrsqrt.pop %v269
    %v281 = vmul.f32 %v280, %v269
    %v282 = vmul.f32 %v281, %v280
    %v283 = vmul.f32 0.5, %v282
    %v284 = vsub.f32 1.5, %v283
    %v285 = vmul.f32 %v280, %v284
    %vm286 = vweird.f32 %v269
    %vm287 = vweird.f32 %v280
    %vm288 = vmor %vm286, %vm287
    %v289 = vsel %vm288, %v280, %v285
    %v290 = vmul.f32 %v256, %v279
    %v291 = vmul.f32 %v257, %v289
    %v292 = vld [vmem:[%s10] sm:$0x1]
    %v294 = vperm.slane %v292, 0
    %v296 = vmul.f32 %v290, %v294
    %v297 = vmul.f32 %v291, %v294
    %v298 = vld [vmem:[%s11] sm:$0x1]
    %v300 = vperm.slane %v298, 0
    %v302 = vadd.f32 %v296, %v300
    %v303 = vadd.f32 %v297, %v300
    %304 = vst.msk [vmem:[#allocation2] sm:$0xff] %vm68, %v302
    %305 = vst.msk [vmem:[#allocation2 + $0x8] sm:$0xff] %vm68, %v303
    // Predicated region
    $region50: #{transformer_encoder_layer.5} parent=1 // pred_check
      _
    $region51: #{transformer_encoder_layer.5} parent=1 // pred_check_branch
      %307 = sbr.rel (0) target = $region53
    $region52: #{transformer_encoder_layer.5} parent=1 // pred_region
      %309 = vsyncadd [#allocation3], 0
      %s310 = sshll.u32 [#allocation2], 4
      %s311 = int_to_ptr.vmem [resolvable:$true] %s310
      %s312 = sshll.u32 %s12, 4
      %s313 = int_to_ptr.hbm [resolvable:$true] %s312
      %318 = dma.vmem_to_hbm [thread:$0]  %s311, 256, %s313, [#allocation3], 128, 128, 8
    $region53: #{transformer_encoder_layer.5} parent=1 // pred_fallthru
      _
    // Predicated region
    $region54: #{transformer_encoder_layer.5} parent=1 // pred_check
      _
    $region55: #{transformer_encoder_layer.5} parent=1 // pred_check_branch
      %320 = sbr.rel (0) target = $region57
    $region56: #{transformer_encoder_layer.5} parent=1 // pred_region
      %322 = dma.done [#allocation3], 256
    $region57: #{transformer_encoder_layer.5} parent=1 // pred_fallthru
      _
    %323 = vsyncpa [#allocation3], 1

</llo_original>
